<compile_context>
chip_gen: v7x
topology: tpu7x:2x2x1
jax: 0.10.0
libtpu: 0.0.40
codegen_flags: <defaults>
</compile_context>

<pallas_src>
import numpy as np
import jax
import jax.numpy as jnp
from jax.experimental import pallas as pl
from jax.experimental.pallas import tpu as pltpu

COMPUTE_DTYPE = jnp.bfloat16          # matmul operand dtype (f32 accumulation)
VMEM_LIMIT_BYTES = 32 * 1024 * 1024   # safe on v5e/v6e/v7x; tiles below are far smaller
HEAD_PAD = 128                        # lane-padded actor||critic head width


def _round_up(x, m):
    return ((x + m - 1) // m) * m


# ----------------------------- Pallas kernels ------------------------------

def _convgemm_pallas(w2, b, colT, tile_l, out_dtype=None):
    """relu(W(Cout,K) @ colT(K,Lp) + b) -> (Cout, Lp), lane-dense, tiled over Lp."""
    cout, K = w2.shape
    K2, Lp = colT.shape
    assert K == K2 and Lp % tile_l == 0
    out_dtype = out_dtype or colT.dtype

    def kernel(w_ref, b_ref, c_ref, o_ref):
        acc = jnp.dot(w_ref[...], c_ref[...], preferred_element_type=jnp.float32)
        o_ref[...] = jnp.maximum(acc + b_ref[...], 0.0).astype(o_ref.dtype)

    return pl.pallas_call(
        kernel,
        out_shape=jax.ShapeDtypeStruct((cout, Lp), out_dtype),
        grid=(Lp // tile_l,),
        in_specs=[
            pl.BlockSpec((cout, K), lambda l: (0, 0)),      # weight stays resident
            pl.BlockSpec((cout, 1), lambda l: (0, 0)),      # bias stays resident
            pl.BlockSpec((K, tile_l), lambda l: (0, l)),    # streamed column tiles
        ],
        out_specs=pl.BlockSpec((cout, tile_l), lambda l: (0, l)),
        compiler_params=pltpu.CompilerParams(
            dimension_semantics=("parallel",),
            vmem_limit_bytes=VMEM_LIMIT_BYTES,
        ),
    )(w2, b, colT)


def _fc_heads_pallas(feats, wfc, bfc, wh, bh, n_actions, tile_b=256):
    """Fused fc-512(+ReLU) + padded actor||critic matmul + in-kernel softmax.

    Returns a (B, HEAD_PAD) f32 slab: cols [0, A) = softmax probs, col A = value.
    """
    B, D = feats.shape
    Hdim = wfc.shape[1]
    P = wh.shape[1]

    tb = min(tile_b, _round_up(B, 8))
    Bp = _round_up(B, tb)
    if Bp > B:
        feats = jnp.pad(feats, ((0, Bp - B), (0, 0)))

    def kernel(x_ref, wfc_ref, bfc_ref, wh_ref, bh_ref, o_ref):
        h = jnp.dot(x_ref[...], wfc_ref[...], preferred_element_type=jnp.float32)
        h = jnp.maximum(h + bfc_ref[...], 0.0)
        z = jnp.dot(h.astype(wh_ref.dtype), wh_ref[...],
                    preferred_element_type=jnp.float32) + bh_ref[...]
        col = jax.lax.broadcasted_iota(jnp.int32, z.shape, 1)
        logits = jnp.where(col < n_actions, z, -jnp.inf)
        m = jnp.max(logits, axis=1, keepdims=True)
        e = jnp.exp(logits - m)
        p = e * pl.reciprocal(jnp.sum(e, axis=1, keepdims=True), approx=True)
        o_ref[...] = jnp.where(col < n_actions, p,
                               jnp.where(col == n_actions, z, 0.0))

    out = pl.pallas_call(
        kernel,
        out_shape=jax.ShapeDtypeStruct((Bp, P), jnp.float32),
        grid=(Bp // tb,),
        in_specs=[
            pl.BlockSpec((tb, D), lambda i: (i, 0)),
            pl.BlockSpec((D, Hdim), lambda i: (0, 0)),
            pl.BlockSpec((1, Hdim), lambda i: (0, 0)),
            pl.BlockSpec((Hdim, P), lambda i: (0, 0)),
            pl.BlockSpec((1, P), lambda i: (0, 0)),
        ],
        out_specs=pl.BlockSpec((tb, P), lambda i: (i, 0)),
        compiler_params=pltpu.CompilerParams(
            dimension_semantics=("parallel",),
            vmem_limit_bytes=VMEM_LIMIT_BYTES,
        ),
    )(feats, wfc, bfc, wh, bh)
    return out[:B]


# ------------------------------ JAX glue -----------------------------------

def conv2d_relu_cnhw(xc, w2, b, k, stride, tile_l=512):
    """xc: (Cin, N, H, W)  ->  (Cout, N, Ho, Wo), im2col^T + lane-dense Pallas GEMM."""
    C, N, H, W = xc.shape
    cout = w2.shape[0]
    Ho = (H - k) // stride + 1
    Wo = (W - k) // stride + 1
    patches = []
    for i in range(k):                 # rows ordered (Cin, kh, kw) to match PyTorch
        for j in range(k):
            patches.append(xc[:, :, i:i + stride * Ho:stride, j:j + stride * Wo:stride])
    colT = jnp.stack(patches, axis=1).reshape(C * k * k, N * Ho * Wo)

    L = N * Ho * Wo
    tl = tile_l if L >= tile_l else _round_up(L, 128)
    Lp = _round_up(L, tl)
    if Lp > L:
        colT = jnp.pad(colT, ((0, 0), (0, Lp - L)))

    y = _convgemm_pallas(w2, b, colT, tl)          # (Cout, Lp)
    return y[:, :L].reshape(cout, N, Ho, Wo)       # CNHW layout for the next layer


def ppo_atari_forward(kp, x, n_actions, kernels=(8, 4, 3), strides=(4, 2, 1),
                      compute_dtype=COMPUTE_DTYPE):
    # x: (N, Cin, H, W) float32 (NCHW, matching the PyTorch module)
    xc = jnp.transpose(x, (1, 0, 2, 3)).astype(compute_dtype)   # one NCHW->CNHW relayout
    for idx, (k, s) in enumerate(zip(kernels, strides), start=1):
        xc = conv2d_relu_cnhw(xc, kp[f"conv{idx}_w2"], kp[f"conv{idx}_b"], k, s)
    C3, N, H3, W3 = xc.shape
    # nn.Flatten order = per-sample (C, H, W); the final activation is tiny.
    feats = jnp.transpose(xc, (1, 0, 2, 3)).reshape(N, C3 * H3 * W3)
    out = _fc_heads_pallas(feats, kp["fc_wT"], kp["fc_b"],
                           kp["head_w"], kp["head_b"], n_actions)
    pi = out[:, :n_actions]
    v = out[:, n_actions:n_actions + 1]
    return pi, v


# --------------------------- parameter init --------------------------------

def orthogonal_init(key, shape, gain):
    # Same semantics as nn.init.orthogonal_.
    rows = shape[0]
    cols = int(np.prod(shape[1:]))
    n, m = (rows, cols) if rows >= cols else (cols, rows)
    a = jax.random.normal(key, (n, m), dtype=jnp.float32)
    q, r = jnp.linalg.qr(a)
    q = q * jnp.sign(jnp.diagonal(r))
    if rows < cols:
        q = q.T
    return (gain * q).reshape(shape).astype(jnp.float32)


def init_params(key, input_dims, n_actions,
                channels=(32, 64, 64), kernels=(8, 4, 3), strides=(4, 2, 1)):
    """PyTorch-layout f32 parameters (reference / checkpoint layout)."""
    C0, H, W = input_dims
    keys = jax.random.split(key, 6)
    s2 = float(np.sqrt(2.0))
    p = {}
    p["conv1_w"] = orthogonal_init(keys[0], (channels[0], C0, kernels[0], kernels[0]), s2)
    p["conv1_b"] = jnp.zeros((channels[0],), jnp.float32)
    p["conv2_w"] = orthogonal_init(keys[1], (channels[1], channels[0], kernels[1], kernels[1]), s2)
    p["conv2_b"] = jnp.zeros((channels[1],), jnp.float32)
    p["conv3_w"] = orthogonal_init(keys[2], (channels[2], channels[1], kernels[2], kernels[2]), s2)
    p["conv3_b"] = jnp.zeros((channels[2],), jnp.float32)
    h, w = H, W
    for k, s in zip(kernels, strides):
        h = (h - k) // s + 1
        w = (w - k) // s + 1
    conv_dims = channels[2] * h * w
    p["fc_w"] = orthogonal_init(keys[3], (512, conv_dims), s2)
    p["fc_b"] = jnp.zeros((512,), jnp.float32)
    p["actor_w"] = orthogonal_init(keys[4], (n_actions, 512), 0.01)
    p["actor_b"] = jnp.zeros((n_actions,), jnp.float32)
    p["critic_w"] = orthogonal_init(keys[5], (1, 512), 1.0)
    p["critic_b"] = jnp.zeros((1,), jnp.float32)
    return p


def prepare_params(p, dtype=COMPUTE_DTYPE, head_pad=HEAD_PAD):
    """Pre-reshape / pre-transpose / pre-pad weights once into GEMM-ready layouts."""
    kp = {}
    for idx in (1, 2, 3):
        w = p[f"conv{idx}_w"]
        cout = w.shape[0]
        kp[f"conv{idx}_w2"] = w.reshape(cout, -1).astype(dtype)            # (Cout, Cin*k*k)
        kp[f"conv{idx}_b"] = p[f"conv{idx}_b"].reshape(cout, 1).astype(jnp.float32)
    kp["fc_wT"] = p["fc_w"].T.astype(dtype)                                # (conv_dims, 512)
    kp["fc_b"] = p["fc_b"].reshape(1, -1).astype(jnp.float32)
    A = p["actor_w"].shape[0]
    wh = jnp.concatenate([p["actor_w"].T, p["critic_w"].T], axis=1)        # (512, A+1)
    bh = jnp.concatenate([p["actor_b"], p["critic_b"]])                    # (A+1,)
    P = max(head_pad, _round_up(A + 1, 128))
    kp["head_w"] = jnp.pad(wh, ((0, 0), (0, P - (A + 1)))).astype(dtype)   # (512, 128)
    kp["head_b"] = jnp.pad(bh, (0, P - (A + 1))).reshape(1, P).astype(jnp.float32)
    return kp


# --------------------------- pure-JAX reference -----------------------------

def ref_forward(p, x, kernels=(8, 4, 3), strides=(4, 2, 1)):
    def conv(xx, w, b, s):
        y = jax.lax.conv_general_dilated(xx, w, (s, s), "VALID",
                                         dimension_numbers=("NCHW", "OIHW", "NCHW"))
        return jax.nn.relu(y + b.reshape(1, -1, 1, 1))
    x = conv(x, p["conv1_w"], p["conv1_b"], strides[0])
    x = conv(x, p["conv2_w"], p["conv2_b"], strides[1])
    x = conv(x, p["conv3_w"], p["conv3_b"], strides[2])
    f = x.reshape(x.shape[0], -1)
    f = jax.nn.relu(f @ p["fc_w"].T + p["fc_b"])
    pi = jax.nn.softmax(f @ p["actor_w"].T + p["actor_b"], axis=1)
    v = f @ p["critic_w"].T + p["critic_b"]
    return pi, v


# ------------------------------ main ----------------------------------------

if __name__ == "__main__":
    # Smallest Atari-like frame stack that survives the 8/4/3 conv stack:
    # 44 -> 10 -> 4 -> 2, conv_dims = 64*2*2 = 256.
    input_dims = (4, 44, 44)
    n_actions = 6
    batch = 2

    key = jax.random.PRNGKey(0)
    pkey, xkey = jax.random.split(key)
    params = init_params(pkey, input_dims, n_actions)
    kparams = prepare_params(params)
    x = jax.random.normal(xkey, (batch,) + input_dims, dtype=jnp.float32)

    fwd = jax.jit(lambda kp, xx: ppo_atari_forward(kp, xx, n_actions))
    pi, v = fwd(kparams, x)
    jax.block_until_ready((pi, v))

    pi_ref, v_ref = ref_forward(params, x)
    jax.block_until_ready((pi_ref, v_ref))

    assert pi.shape == (batch, n_actions) and v.shape == (batch, 1)
    assert np.all(np.isfinite(np.asarray(pi))) and np.all(np.isfinite(np.asarray(v)))
    assert np.allclose(np.asarray(jnp.sum(pi, axis=1)), 1.0, atol=1e-2)
    # bf16 matmul operands + approx reciprocal -> loose tolerance vs f32 reference.
    assert np.allclose(np.asarray(pi), np.asarray(pi_ref), atol=5e-2)
    assert np.allclose(np.asarray(v), np.asarray(v_ref), rtol=2e-1, atol=5e-1)
    print("KERNEL_OK")
</pallas_src>

<mosaic_0001>
module attributes {stable_mosaic.version = 11 : i64} {
  func.func @kernel(%arg0: i32, %arg1: memref<32x256xbf16, #tpu.memory_space<vmem>>, %arg2: memref<32x1xf32, #tpu.memory_space<vmem>>, %arg3: memref<256x256xbf16, #tpu.memory_space<vmem>>, %arg4: memref<32x256xbf16, #tpu.memory_space<vmem>>) attributes {dimension_semantics = [#tpu.dimension_semantics<parallel>], iteration_bounds = array<i64: 1>, scalar_prefetch = 0 : i64, scratch_operands = 0 : i64, tpu.core_type = #tpu.core_type<tc>, window_params = [{pipeline_mode = #tpu.pipeline_mode<synchronous>, transform_indices = @transform_0, window_bounds = array<i64: 32, 256>}, {pipeline_mode = #tpu.pipeline_mode<synchronous>, transform_indices = @transform_1, window_bounds = array<i64: 32, 1>}, {transform_indices = @transform_2, window_bounds = array<i64: 256, 256>}, {transform_indices = @transform_3, window_bounds = array<i64: 32, 256>}]} {
    %c0 = arith.constant 0 : index
    %c0_0 = arith.constant 0 : index
    %0 = vector.load %arg1[%c0, %c0_0] : memref<32x256xbf16, #tpu.memory_space<vmem>>, vector<32x256xbf16>
    %c0_1 = arith.constant 0 : index
    %c0_2 = arith.constant 0 : index
    %1 = vector.load %arg3[%c0_1, %c0_2] : memref<256x256xbf16, #tpu.memory_space<vmem>>, vector<256x256xbf16>
    %cst = arith.constant dense<0.000000e+00> : vector<32x256xf32>
    %2 = tpu.matmul %0, %1, %cst {dimension_numbers = #tpu.dot_dimension_numbers<[1], [0], [0], [1], [0, 0, 1, 1], [], []>} : vector<32x256xbf16>, vector<256x256xbf16>, vector<32x256xf32> -> vector<32x256xf32>
    %c0_3 = arith.constant 0 : index
    %c0_4 = arith.constant 0 : index
    %3 = vector.load %arg2[%c0_3, %c0_4] : memref<32x1xf32, #tpu.memory_space<vmem>>, vector<32x1xf32>
    %4 = vector.broadcast %3 : vector<32x1xf32> to vector<32x256xf32>
    %5 = arith.addf %2, %4 : vector<32x256xf32>
    %cst_5 = arith.constant 0.000000e+00 : f32
    %6 = vector.broadcast %cst_5 : f32 to vector<32x256xf32>
    %7 = arith.maximumf %5, %6 : vector<32x256xf32>
    %8 = arith.truncf %7 : vector<32x256xf32> to vector<32x256xbf16>
    %c0_6 = arith.constant 0 : index
    %c0_7 = arith.constant 0 : index
    %9 = vector.load %arg4[%c0_6, %c0_7] : memref<32x256xbf16, #tpu.memory_space<vmem>>, vector<32x256xbf16>
    tpu.vector_store %arg4[%c0_6, %c0_7], %8 {strides = array<i32>} : memref<32x256xbf16, #tpu.memory_space<vmem>>, vector<32x256xbf16>,
    return
  }
  func.func @transform_0(%arg0: i32) -> (i32, i32) {
    %c0_i32 = arith.constant 0 : i32
    %c0_i32_0 = arith.constant 0 : i32
    %c0_i32_1 = arith.constant 0 : i32
    return %c0_i32, %c0_i32_0 : i32, i32
  }
  func.func @transform_1(%arg0: i32) -> (i32, i32) {
    %c0_i32 = arith.constant 0 : i32
    %c0_i32_0 = arith.constant 0 : i32
    %c0_i32_1 = arith.constant 0 : i32
    return %c0_i32, %c0_i32_0 : i32, i32
  }
  func.func @transform_2(%arg0: i32) -> (i32, i32) {
    %c0_i32 = arith.constant 0 : i32
    %c0_i32_0 = arith.constant 0 : i32
    return %c0_i32, %arg0 : i32, i32
  }
  func.func @transform_3(%arg0: i32) -> (i32, i32) {
    %c0_i32 = arith.constant 0 : i32
    %c0_i32_0 = arith.constant 0 : i32
    return %c0_i32, %arg0 : i32, i32
  }
}

module attributes {stable_mosaic.version = 11 : i64} {
  func.func @kernel(%arg0: i32, %arg1: memref<64x512xbf16, #tpu.memory_space<vmem>>, %arg2: memref<64x1xf32, #tpu.memory_space<vmem>>, %arg3: memref<512x128xbf16, #tpu.memory_space<vmem>>, %arg4: memref<64x128xbf16, #tpu.memory_space<vmem>>) attributes {dimension_semantics = [#tpu.dimension_semantics<parallel>], iteration_bounds = array<i64: 1>, scalar_prefetch = 0 : i64, scratch_operands = 0 : i64, tpu.core_type = #tpu.core_type<tc>, window_params = [{pipeline_mode = #tpu.pipeline_mode<synchronous>, transform_indices = @transform_0, window_bounds = array<i64: 64, 512>}, {pipeline_mode = #tpu.pipeline_mode<synchronous>, transform_indices = @transform_1, window_bounds = array<i64: 64, 1>}, {transform_indices = @transform_2, window_bounds = array<i64: 512, 128>}, {transform_indices = @transform_3, window_bounds = array<i64: 64, 128>}]} {
    %c0 = arith.constant 0 : index
    %c0_0 = arith.constant 0 : index
    %0 = vector.load %arg1[%c0, %c0_0] : memref<64x512xbf16, #tpu.memory_space<vmem>>, vector<64x512xbf16>
    %c0_1 = arith.constant 0 : index
    %c0_2 = arith.constant 0 : index
    %1 = vector.load %arg3[%c0_1, %c0_2] : memref<512x128xbf16, #tpu.memory_space<vmem>>, vector<512x128xbf16>
    %cst = arith.constant dense<0.000000e+00> : vector<64x128xf32>
    %2 = tpu.matmul %0, %1, %cst {dimension_numbers = #tpu.dot_dimension_numbers<[1], [0], [0], [1], [0, 0, 1, 1], [], []>} : vector<64x512xbf16>, vector<512x128xbf16>, vector<64x128xf32> -> vector<64x128xf32>
    %c0_3 = arith.constant 0 : index
    %c0_4 = arith.constant 0 : index
    %3 = vector.load %arg2[%c0_3, %c0_4] : memref<64x1xf32, #tpu.memory_space<vmem>>, vector<64x1xf32>
    %4 = vector.broadcast %3 : vector<64x1xf32> to vector<64x128xf32>
    %5 = arith.addf %2, %4 : vector<64x128xf32>
    %cst_5 = arith.constant 0.000000e+00 : f32
    %6 = vector.broadcast %cst_5 : f32 to vector<64x128xf32>
    %7 = arith.maximumf %5, %6 : vector<64x128xf32>
    %8 = arith.truncf %7 : vector<64x128xf32> to vector<64x128xbf16>
    %c0_6 = arith.constant 0 : index
    %c0_7 = arith.constant 0 : index
    %9 = vector.load %arg4[%c0_6, %c0_7] : memref<64x128xbf16, #tpu.memory_space<vmem>>, vector<64x128xbf16>
    tpu.vector_store %arg4[%c0_6, %c0_7], %8 {strides = array<i32>} : memref<64x128xbf16, #tpu.memory_space<vmem>>, vector<64x128xbf16>,
    return
  }
  func.func @transform_0(%arg0: i32) -> (i32, i32) {
    %c0_i32 = arith.constant 0 : i32
    %c0_i32_0 = arith.constant 0 : i32
    %c0_i32_1 = arith.constant 0 : i32
    return %c0_i32, %c0_i32_0 : i32, i32
  }
  func.func @transform_1(%arg0: i32) -> (i32, i32) {
    %c0_i32 = arith.constant 0 : i32
    %c0_i32_0 = arith.constant 0 : i32
    %c0_i32_1 = arith.constant 0 : i32
    return %c0_i32, %c0_i32_0 : i32, i32
  }
  func.func @transform_2(%arg0: i32) -> (i32, i32) {
    %c0_i32 = arith.constant 0 : i32
    %c0_i32_0 = arith.constant 0 : i32
    return %c0_i32, %arg0 : i32, i32
  }
  func.func @transform_3(%arg0: i32) -> (i32, i32) {
    %c0_i32 = arith.constant 0 : i32
    %c0_i32_0 = arith.constant 0 : i32
    return %c0_i32, %arg0 : i32, i32
  }
}

module attributes {stable_mosaic.version = 11 : i64} {
  func.func @kernel(%arg0: i32, %arg1: memref<64x576xbf16, #tpu.memory_space<vmem>>, %arg2: memref<64x1xf32, #tpu.memory_space<vmem>>, %arg3: memref<576x128xbf16, #tpu.memory_space<vmem>>, %arg4: memref<64x128xbf16, #tpu.memory_space<vmem>>) attributes {dimension_semantics = [#tpu.dimension_semantics<parallel>], iteration_bounds = array<i64: 1>, scalar_prefetch = 0 : i64, scratch_operands = 0 : i64, tpu.core_type = #tpu.core_type<tc>, window_params = [{pipeline_mode = #tpu.pipeline_mode<synchronous>, transform_indices = @transform_0, window_bounds = array<i64: 64, 576>}, {pipeline_mode = #tpu.pipeline_mode<synchronous>, transform_indices = @transform_1, window_bounds = array<i64: 64, 1>}, {transform_indices = @transform_2, window_bounds = array<i64: 576, 128>}, {transform_indices = @transform_3, window_bounds = array<i64: 64, 128>}]} {
    %c0 = arith.constant 0 : index
    %c0_0 = arith.constant 0 : index
    %0 = vector.load %arg1[%c0, %c0_0] : memref<64x576xbf16, #tpu.memory_space<vmem>>, vector<64x576xbf16>
    %c0_1 = arith.constant 0 : index
    %c0_2 = arith.constant 0 : index
    %1 = vector.load %arg3[%c0_1, %c0_2] : memref<576x128xbf16, #tpu.memory_space<vmem>>, vector<576x128xbf16>
    %cst = arith.constant dense<0.000000e+00> : vector<64x128xf32>
    %2 = tpu.matmul %0, %1, %cst {dimension_numbers = #tpu.dot_dimension_numbers<[1], [0], [0], [1], [0, 0, 1, 1], [], []>} : vector<64x576xbf16>, vector<576x128xbf16>, vector<64x128xf32> -> vector<64x128xf32>
    %c0_3 = arith.constant 0 : index
    %c0_4 = arith.constant 0 : index
    %3 = vector.load %arg2[%c0_3, %c0_4] : memref<64x1xf32, #tpu.memory_space<vmem>>, vector<64x1xf32>
    %4 = vector.broadcast %3 : vector<64x1xf32> to vector<64x128xf32>
    %5 = arith.addf %2, %4 : vector<64x128xf32>
    %cst_5 = arith.constant 0.000000e+00 : f32
    %6 = vector.broadcast %cst_5 : f32 to vector<64x128xf32>
    %7 = arith.maximumf %5, %6 : vector<64x128xf32>
    %8 = arith.truncf %7 : vector<64x128xf32> to vector<64x128xbf16>
    %c0_6 = arith.constant 0 : index
    %c0_7 = arith.constant 0 : index
    %9 = vector.load %arg4[%c0_6, %c0_7] : memref<64x128xbf16, #tpu.memory_space<vmem>>, vector<64x128xbf16>
    tpu.vector_store %arg4[%c0_6, %c0_7], %8 {strides = array<i32>} : memref<64x128xbf16, #tpu.memory_space<vmem>>, vector<64x128xbf16>,
    return
  }
  func.func @transform_0(%arg0: i32) -> (i32, i32) {
    %c0_i32 = arith.constant 0 : i32
    %c0_i32_0 = arith.constant 0 : i32
    %c0_i32_1 = arith.constant 0 : i32
    return %c0_i32, %c0_i32_0 : i32, i32
  }
  func.func @transform_1(%arg0: i32) -> (i32, i32) {
    %c0_i32 = arith.constant 0 : i32
    %c0_i32_0 = arith.constant 0 : i32
    %c0_i32_1 = arith.constant 0 : i32
    return %c0_i32, %c0_i32_0 : i32, i32
  }
  func.func @transform_2(%arg0: i32) -> (i32, i32) {
    %c0_i32 = arith.constant 0 : i32
    %c0_i32_0 = arith.constant 0 : i32
    return %c0_i32, %arg0 : i32, i32
  }
  func.func @transform_3(%arg0: i32) -> (i32, i32) {
    %c0_i32 = arith.constant 0 : i32
    %c0_i32_0 = arith.constant 0 : i32
    return %c0_i32, %arg0 : i32, i32
  }
}

module attributes {stable_mosaic.version = 11 : i64} {
  func.func @kernel(%arg0: i32, %arg1: memref<8x256xbf16, #tpu.memory_space<vmem>>, %arg2: memref<256x512xbf16, #tpu.memory_space<vmem>>, %arg3: memref<1x512xf32, #tpu.memory_space<vmem>>, %arg4: memref<512x128xbf16, #tpu.memory_space<vmem>>, %arg5: memref<1x128xf32, #tpu.memory_space<vmem>>, %arg6: memref<8x128xf32, #tpu.memory_space<vmem>>) attributes {dimension_semantics = [#tpu.dimension_semantics<parallel>], iteration_bounds = array<i64: 1>, scalar_prefetch = 0 : i64, scratch_operands = 0 : i64, tpu.core_type = #tpu.core_type<tc>, window_params = [{transform_indices = @transform_0, window_bounds = array<i64: 8, 256>}, {pipeline_mode = #tpu.pipeline_mode<synchronous>, transform_indices = @transform_1, window_bounds = array<i64: 256, 512>}, {pipeline_mode = #tpu.pipeline_mode<synchronous>, transform_indices = @transform_2, window_bounds = array<i64: 1, 512>}, {pipeline_mode = #tpu.pipeline_mode<synchronous>, transform_indices = @transform_3, window_bounds = array<i64: 512, 128>}, {pipeline_mode = #tpu.pipeline_mode<synchronous>, transform_indices = @transform_4, window_bounds = array<i64: 1, 128>}, {transform_indices = @transform_5, window_bounds = array<i64: 8, 128>}]} {
    %c0 = arith.constant 0 : index
    %c0_0 = arith.constant 0 : index
    %0 = vector.load %arg1[%c0, %c0_0] : memref<8x256xbf16, #tpu.memory_space<vmem>>, vector<8x256xbf16>
    %c0_1 = arith.constant 0 : index
    %c0_2 = arith.constant 0 : index
    %1 = vector.load %arg2[%c0_1, %c0_2] : memref<256x512xbf16, #tpu.memory_space<vmem>>, vector<256x512xbf16>
    %cst = arith.constant dense<0.000000e+00> : vector<8x512xf32>
    %2 = tpu.matmul %0, %1, %cst {dimension_numbers = #tpu.dot_dimension_numbers<[1], [0], [0], [1], [0, 0, 1, 1], [], []>} : vector<8x256xbf16>, vector<256x512xbf16>, vector<8x512xf32> -> vector<8x512xf32>
    %c0_3 = arith.constant 0 : index
    %c0_4 = arith.constant 0 : index
    %3 = vector.load %arg3[%c0_3, %c0_4] : memref<1x512xf32, #tpu.memory_space<vmem>>, vector<1x512xf32>
    %4 = vector.broadcast %3 : vector<1x512xf32> to vector<8x512xf32>
    %5 = arith.addf %2, %4 : vector<8x512xf32>
    %cst_5 = arith.constant 0.000000e+00 : f32
    %6 = vector.broadcast %cst_5 : f32 to vector<8x512xf32>
    %7 = arith.maximumf %5, %6 : vector<8x512xf32>
    %8 = arith.truncf %7 : vector<8x512xf32> to vector<8x512xbf16>
    %c0_6 = arith.constant 0 : index
    %c0_7 = arith.constant 0 : index
    %9 = vector.load %arg4[%c0_6, %c0_7] : memref<512x128xbf16, #tpu.memory_space<vmem>>, vector<512x128xbf16>
    %cst_8 = arith.constant dense<0.000000e+00> : vector<8x128xf32>
    %10 = tpu.matmul %8, %9, %cst_8 {dimension_numbers = #tpu.dot_dimension_numbers<[1], [0], [0], [1], [0, 0, 1, 1], [], []>} : vector<8x512xbf16>, vector<512x128xbf16>, vector<8x128xf32> -> vector<8x128xf32>
    %c0_9 = arith.constant 0 : index
    %c0_10 = arith.constant 0 : index
    %11 = vector.load %arg5[%c0_9, %c0_10] : memref<1x128xf32, #tpu.memory_space<vmem>>, vector<1x128xf32>
    %12 = vector.broadcast %11 : vector<1x128xf32> to vector<8x128xf32>
    %13 = arith.addf %10, %12 : vector<8x128xf32>
    %14 = tpu.iota {dimensions = array<i32: 1>} : vector<8x128xi32>
    %c6_i32 = arith.constant 6 : i32
    %15 = vector.broadcast %c6_i32 : i32 to vector<8x128xi32>
    %16 = arith.cmpi slt, %14, %15 : vector<8x128xi32>
    %cst_11 = arith.constant 0xFF800000 : f32
    %17 = vector.broadcast %cst_11 : f32 to vector<8x128xf32>
    %18 = arith.select %16, %13, %17 : vector<8x128xi1>, vector<8x128xf32>
    %cst_12 = arith.constant dense<0xFF800000> : vector<8xf32>
    %19 = vector.multi_reduction <maximumf>, %18, %cst_12 [1] : vector<8x128xf32> to vector<8xf32>
    %20 = vector.shape_cast %19 : vector<8xf32> to vector<8x1xf32>
    %21 = vector.broadcast %20 : vector<8x1xf32> to vector<8x128xf32>
    %22 = arith.subf %18, %21 : vector<8x128xf32>
    %23 = math.exp %22 : vector<8x128xf32>
    %cst_13 = arith.constant dense<0.000000e+00> : vector<8xf32>
    %24 = vector.multi_reduction <add>, %23, %cst_13 [1] : vector<8x128xf32> to vector<8xf32>
    %25 = vector.shape_cast %24 : vector<8xf32> to vector<8x1xf32>
    %26 = tpu.reciprocal %25 {approx = true} : vector<8x1xf32> -> vector<8x1xf32>
    %27 = vector.broadcast %26 : vector<8x1xf32> to vector<8x128xf32>
    %28 = arith.mulf %23, %27 : vector<8x128xf32>
    %c6_i32_14 = arith.constant 6 : i32
    %29 = vector.broadcast %c6_i32_14 : i32 to vector<8x128xi32>
    %30 = arith.cmpi slt, %14, %29 : vector<8x128xi32>
    %c6_i32_15 = arith.constant 6 : i32
    %31 = vector.broadcast %c6_i32_15 : i32 to vector<8x128xi32>
    %32 = arith.cmpi eq, %14, %31 : vector<8x128xi32>
    %cst_16 = arith.constant 0.000000e+00 : f32
    %33 = vector.broadcast %cst_16 : f32 to vector<8x128xf32>
    %34 = arith.select %32, %13, %33 : vector<8x128xi1>, vector<8x128xf32>
    %35 = arith.select %30, %28, %34 : vector<8x128xi1>, vector<8x128xf32>
    %c0_17 = arith.constant 0 : index
    %c0_18 = arith.constant 0 : index
    %36 = vector.load %arg6[%c0_17, %c0_18] : memref<8x128xf32, #tpu.memory_space<vmem>>, vector<8x128xf32>
    tpu.vector_store %arg6[%c0_17, %c0_18], %35 {strides = array<i32>} : memref<8x128xf32, #tpu.memory_space<vmem>>, vector<8x128xf32>,
    return
  }
  func.func @transform_0(%arg0: i32) -> (i32, i32) {
    %c0_i32 = arith.constant 0 : i32
    %c0_i32_0 = arith.constant 0 : i32
    return %arg0, %c0_i32 : i32, i32
  }
  func.func @transform_1(%arg0: i32) -> (i32, i32) {
    %c0_i32 = arith.constant 0 : i32
    %c0_i32_0 = arith.constant 0 : i32
    %c0_i32_1 = arith.constant 0 : i32
    return %c0_i32, %c0_i32_0 : i32, i32
  }
  func.func @transform_2(%arg0: i32) -> (i32, i32) {
    %c0_i32 = arith.constant 0 : i32
    %c0_i32_0 = arith.constant 0 : i32
    %c0_i32_1 = arith.constant 0 : i32
    return %c0_i32, %c0_i32_0 : i32, i32
  }
  func.func @transform_3(%arg0: i32) -> (i32, i32) {
    %c0_i32 = arith.constant 0 : i32
    %c0_i32_0 = arith.constant 0 : i32
    %c0_i32_1 = arith.constant 0 : i32
    return %c0_i32, %c0_i32_0 : i32, i32
  }
  func.func @transform_4(%arg0: i32) -> (i32, i32) {
    %c0_i32 = arith.constant 0 : i32
    %c0_i32_0 = arith.constant 0 : i32
    %c0_i32_1 = arith.constant 0 : i32
    return %c0_i32, %c0_i32_0 : i32, i32
  }
  func.func @transform_5(%arg0: i32) -> (i32, i32) {
    %c0_i32 = arith.constant 0 : i32
    %c0_i32_0 = arith.constant 0 : i32
    return %arg0, %c0_i32 : i32, i32
  }
}

</mosaic_0001>

<llo_original>
// kernel: _lambda_.4
$region0: #{_lambda_.4}
  #allocation0 [shape = 'u32[]', space=smem, size = 0x4, offset = 0x4, fixed_abs, tag = 'smem constant byte address 0x4 - core index']
  #allocation1 [shape = 'u32[144,128]{1,0:T(1,128)}', space=vmem, size = 0x12000, scoped, tag = 'internal scratch']
  %s0 = inlined_call_operand.vmem [shape: bf16[32,256], index: 0, kind: input, shape index: {}]
  %s1 = inlined_call_operand.vmem [shape: f32[32,1], index: 1, kind: input, shape index: {}]
  %s2 = inlined_call_operand.vmem [shape: bf16[256,256], index: 2, kind: input, shape index: {}]
  %s3 = inlined_call_operand.vmem [shape: bf16[32,256], index: 3, kind: output, shape index: {}]
  %s4 = sld [smem:[#allocation0]]
  $region22: #{_lambda_.4} parent=0
    _
  %s6 = ssub.s32 1, %s4
  %s7 = scalar_select 0, %s6, %s4
  // Predicated region
  $region2: #{_lambda_.4} parent=0 // pred_check
    _
  $region3: #{_lambda_.4} parent=0 // pred_check_branch
    %9 = sbr.rel (0) target = $region5
  $region4: #{_lambda_.4} parent=0 // pred_region
    _
  $region5: #{_lambda_.4} parent=0 // pred_fallthru
    _
  // Predicated region
  $region6: #{_lambda_.4} parent=0 // pred_check
    _
  $region7: #{_lambda_.4} parent=0 // pred_check_branch
    %11 = sbr.rel (0) target = $region9
  $region8: #{_lambda_.4} parent=0 // pred_region
    _
  $region9: #{_lambda_.4} parent=0 // pred_fallthru
    _
  // Predicated region
  $region10: #{_lambda_.4} parent=0 // pred_check
    _
  $region11: #{_lambda_.4} parent=0 // pred_check_branch
    %13 = sbr.rel (0) target = $region13
  $region12: #{_lambda_.4} parent=0 // pred_region
    _
  $region13: #{_lambda_.4} parent=0 // pred_fallthru
    _
  %v14 = vld [vmem:[%s0] sm:$0xff]
  %v15 = vld [vmem:[%s0 + $0x8] sm:$0xff]
  %v16 = vld [vmem:[%s0 + $0x10] sm:$0xff]
  %v17 = vld [vmem:[%s0 + $0x18] sm:$0xff]
  %v18 = vld [vmem:[%s2] sm:$0xff]
  %v19 = vld [vmem:[%s2 + $0x8] sm:$0xff]
  %v20 = vld [vmem:[%s2 + $0x10] sm:$0xff]
  %v21 = vld [vmem:[%s2 + $0x18] sm:$0xff]
  %v22 = vld [vmem:[%s2 + $0x20] sm:$0xff]
  %v23 = vld [vmem:[%s2 + $0x28] sm:$0xff]
  %v24 = vld [vmem:[%s2 + $0x30] sm:$0xff]
  %v25 = vld [vmem:[%s2 + $0x38] sm:$0xff]
  %v26 = vld [vmem:[%s2 + $0x40] sm:$0xff]
  %v27 = vld [vmem:[%s2 + $0x48] sm:$0xff]
  %v28 = vld [vmem:[%s2 + $0x50] sm:$0xff]
  %v29 = vld [vmem:[%s2 + $0x58] sm:$0xff]
  %v30 = vld [vmem:[%s2 + $0x60] sm:$0xff]
  %v31 = vld [vmem:[%s2 + $0x68] sm:$0xff]
  %v32 = vld [vmem:[%s2 + $0x70] sm:$0xff]
  %v33 = vld [vmem:[%s2 + $0x78] sm:$0xff]
  %v34 = vld [vmem:[%s2 + $0x80] sm:$0xff]
  %v35 = vld [vmem:[%s2 + $0x88] sm:$0xff]
  %v36 = vld [vmem:[%s2 + $0x90] sm:$0xff]
  %v37 = vld [vmem:[%s2 + $0x98] sm:$0xff]
  %v38 = vld [vmem:[%s2 + $0xa0] sm:$0xff]
  %v39 = vld [vmem:[%s2 + $0xa8] sm:$0xff]
  %v40 = vld [vmem:[%s2 + $0xb0] sm:$0xff]
  %v41 = vld [vmem:[%s2 + $0xb8] sm:$0xff]
  %v42 = vld [vmem:[%s2 + $0xc0] sm:$0xff]
  %v43 = vld [vmem:[%s2 + $0xc8] sm:$0xff]
  %v44 = vld [vmem:[%s2 + $0xd0] sm:$0xff]
  %v45 = vld [vmem:[%s2 + $0xd8] sm:$0xff]
  %v46 = vld [vmem:[%s2 + $0xe0] sm:$0xff]
  %v47 = vld [vmem:[%s2 + $0xe8] sm:$0xff]
  %v48 = vld [vmem:[%s2 + $0xf0] sm:$0xff]
  %v49 = vld [vmem:[%s2 + $0xf8] sm:$0xff]
  %v50 = vld [vmem:[%s1] sm:$0xff]
  %v51 = vld [vmem:[%s1 + $0x8] sm:$0xff]
  %v52 = vld [vmem:[%s1 + $0x10] sm:$0xff]
  %v53 = vld [vmem:[%s1 + $0x18] sm:$0xff]
  %55 = vset.pattern.permute.xlu0 0
  %56 = vperm.xlu0 %55, %v50
  %v57 = vpop.permute.xlu0 %56
  %60 = vset.pattern.permute.xlu0 0
  %61 = vperm.xlu0 %60, %v51
  %v62 = vpop.permute.xlu0 %61
  %65 = vset.pattern.permute.xlu0 0
  %66 = vperm.xlu0 %65, %v52
  %v67 = vpop.permute.xlu0 %66
  %70 = vset.pattern.permute.xlu0 0
  %71 = vperm.xlu0 %70, %v53
  %v72 = vpop.permute.xlu0 %71
  %v78 = vunpack.c.l.b16 %v14
  %v79 = vunpack.c.h.b16 %v14
  %v80 = vunpack.c.l.b16 %v15
  %v81 = vunpack.c.h.b16 %v15
  %v82 = vunpack.c.l.b16 %v16
  %v83 = vunpack.c.h.b16 %v16
  %v84 = vunpack.c.l.b16 %v17
  %v85 = vunpack.c.h.b16 %v17
  %v86 = vpack.c.b16 %v80, %v78
  %v87 = vpack.c.b16 %v81, %v79
  %v88 = vpack.c.b16 %v84, %v82
  %v89 = vpack.c.b16 %v85, %v83
  %v126 = vunpack.c.l.b16 %v18
  %v127 = vunpack.c.h.b16 %v18
  %v128 = vunpack.c.l.b16 %v19
  %v129 = vunpack.c.h.b16 %v19
  %v130 = vunpack.c.l.b16 %v20
  %v131 = vunpack.c.h.b16 %v20
  %v132 = vunpack.c.l.b16 %v21
  %v133 = vunpack.c.h.b16 %v21
  %v134 = vunpack.c.l.b16 %v22
  %v135 = vunpack.c.h.b16 %v22
  %v136 = vunpack.c.l.b16 %v23
  %v137 = vunpack.c.h.b16 %v23
  %v138 = vunpack.c.l.b16 %v24
  %v139 = vunpack.c.h.b16 %v24
  %v140 = vunpack.c.l.b16 %v25
  %v141 = vunpack.c.h.b16 %v25
  %v142 = vunpack.c.l.b16 %v26
  %v143 = vunpack.c.h.b16 %v26
  %v144 = vunpack.c.l.b16 %v27
  %v145 = vunpack.c.h.b16 %v27
  %v146 = vunpack.c.l.b16 %v28
  %v147 = vunpack.c.h.b16 %v28
  %v148 = vunpack.c.l.b16 %v29
  %v149 = vunpack.c.h.b16 %v29
  %v150 = vunpack.c.l.b16 %v30
  %v151 = vunpack.c.h.b16 %v30
  %v152 = vunpack.c.l.b16 %v31
  %v153 = vunpack.c.h.b16 %v31
  %v154 = vunpack.c.l.b16 %v32
  %v155 = vunpack.c.h.b16 %v32
  %v156 = vunpack.c.l.b16 %v33
  %v157 = vunpack.c.h.b16 %v33
  %v158 = vunpack.c.l.b16 %v34
  %v159 = vunpack.c.h.b16 %v34
  %v160 = vunpack.c.l.b16 %v35
  %v161 = vunpack.c.h.b16 %v35
  %v162 = vunpack.c.l.b16 %v36
  %v163 = vunpack.c.h.b16 %v36
  %v164 = vunpack.c.l.b16 %v37
  %v165 = vunpack.c.h.b16 %v37
  %v166 = vunpack.c.l.b16 %v38
  %v167 = vunpack.c.h.b16 %v38
  %v168 = vunpack.c.l.b16 %v39
  %v169 = vunpack.c.h.b16 %v39
  %v170 = vunpack.c.l.b16 %v40
  %v171 = vunpack.c.h.b16 %v40
  %v172 = vunpack.c.l.b16 %v41
  %v173 = vunpack.c.h.b16 %v41
  %v174 = vunpack.c.l.b16 %v42
  %v175 = vunpack.c.h.b16 %v42
  %v176 = vunpack.c.l.b16 %v43
  %v177 = vunpack.c.h.b16 %v43
  %v178 = vunpack.c.l.b16 %v44
  %v179 = vunpack.c.h.b16 %v44
  %v180 = vunpack.c.l.b16 %v45
  %v181 = vunpack.c.h.b16 %v45
  %v182 = vunpack.c.l.b16 %v46
  %v183 = vunpack.c.h.b16 %v46
  %v184 = vunpack.c.l.b16 %v47
  %v185 = vunpack.c.h.b16 %v47
  %v186 = vunpack.c.l.b16 %v48
  %v187 = vunpack.c.h.b16 %v48
  %v188 = vunpack.c.l.b16 %v49
  %v189 = vunpack.c.h.b16 %v49
  %v190 = vpack.c.b16 %v128, %v126
  %v191 = vpack.c.b16 %v129, %v127
  %v192 = vpack.c.b16 %v132, %v130
  %v193 = vpack.c.b16 %v133, %v131
  %v194 = vpack.c.b16 %v136, %v134
  %v195 = vpack.c.b16 %v137, %v135
  %v196 = vpack.c.b16 %v140, %v138
  %v197 = vpack.c.b16 %v141, %v139
  %v198 = vpack.c.b16 %v144, %v142
  %v199 = vpack.c.b16 %v145, %v143
  %v200 = vpack.c.b16 %v148, %v146
  %v201 = vpack.c.b16 %v149, %v147
  %v202 = vpack.c.b16 %v152, %v150
  %v203 = vpack.c.b16 %v153, %v151
  %v204 = vpack.c.b16 %v156, %v154
  %v205 = vpack.c.b16 %v157, %v155
  %v206 = vpack.c.b16 %v160, %v158
  %v207 = vpack.c.b16 %v161, %v159
  %v208 = vpack.c.b16 %v164, %v162
  %v209 = vpack.c.b16 %v165, %v163
  %v210 = vpack.c.b16 %v168, %v166
  %v211 = vpack.c.b16 %v169, %v167
  %v212 = vpack.c.b16 %v172, %v170
  %v213 = vpack.c.b16 %v173, %v171
  %v214 = vpack.c.b16 %v176, %v174
  %v215 = vpack.c.b16 %v177, %v175
  %v216 = vpack.c.b16 %v180, %v178
  %v217 = vpack.c.b16 %v181, %v179
  %v218 = vpack.c.b16 %v184, %v182
  %v219 = vpack.c.b16 %v185, %v183
  %v220 = vpack.c.b16 %v188, %v186
  %v221 = vpack.c.b16 %v189, %v187
  %254 = vmatprep.subr.bf16.mxu0 %v191
  %255 = vmatpush1.bf16.msra.mxu0 %v190
  %256 = vmatprep.subr.bf16.mxu0 %v193
  %257 = vmatpush1.bf16.msra.mxu0 %v192
  %258 = vmatprep.subr.bf16.mxu0 %v195
  %259 = vmatpush1.bf16.msra.mxu0 %v194
  %260 = vmatprep.subr.bf16.mxu0 %v197
  %261 = vmatpush1.bf16.msra.mxu0 %v196
  %262 = vmatprep.subr.bf16.mxu0 %v199
  %263 = vmatpush1.bf16.msra.mxu0 %v198
  %264 = vmatprep.subr.bf16.mxu0 %v201
  %265 = vmatpush1.bf16.msra.mxu0 %v200
  %266 = vmatprep.subr.bf16.mxu0 %v203
  %267 = vmatpush1.bf16.msra.mxu0 %v202
  %268 = vmatprep.subr.bf16.mxu0 %v205
  %269 = vmatpush1.bf16.msra.mxu0 %v204
  %270 = vmatprep.subr.bf16.mxu0 %v207
  %271 = vmatpush1.bf16.msra.mxu0 %v206
  %272 = vmatprep.subr.bf16.mxu0 %v209
  %273 = vmatpush1.bf16.msra.mxu0 %v208
  %274 = vmatprep.subr.bf16.mxu0 %v211
  %275 = vmatpush1.bf16.msra.mxu0 %v210
  %276 = vmatprep.subr.bf16.mxu0 %v213
  %277 = vmatpush1.bf16.msra.mxu0 %v212
  %278 = vmatprep.subr.bf16.mxu0 %v215
  %279 = vmatpush1.bf16.msra.mxu0 %v214
  %280 = vmatprep.subr.bf16.mxu0 %v217
  %281 = vmatpush1.bf16.msra.mxu0 %v216
  %282 = vmatprep.subr.bf16.mxu0 %v219
  %283 = vmatpush1.bf16.msra.mxu0 %v218
  %284 = vmatprep.subr.bf16.mxu0 %v221
  %285 = vmatpush1.bf16.msra.mxu0 %v220
  %286 = vmatprep.mubr.bf16.mxu0 %v87
  %287 = vmatmul.mubr.bf16.gmra.mrb[0].mxu0 %v86
  %v288 = vpop.f32.mrb[0].mxu0
  %v289 = vadd.f32 %v57, %v288
  %v290 = vpop.f32.mrb[0].mxu0
  %v291 = vadd.f32 %v57, %v290
  %v292 = vpop.f32.mrb[0].mxu0
  %v293 = vadd.f32 %v62, %v292
  %v294 = vpop.f32.mrb[0].mxu0
  %v295 = vadd.f32 %v62, %v294
  %296 = vmatprep.mubr.bf16.mxu0 %v89
  %297 = vmatmul.mubr.bf16.gmra.mrb[0].mxu0 %v88
  %v298 = vpop.f32.mrb[0].mxu0
  %v299 = vadd.f32 %v67, %v298
  %v300 = vpop.f32.mrb[0].mxu0
  %v301 = vadd.f32 %v67, %v300
  %v302 = vpop.f32.mrb[0].mxu0
  %v303 = vadd.f32 %v72, %v302
  %v304 = vpop.f32.mrb[0].mxu0
  %v305 = vadd.f32 %v72, %v304
  %306 = vdwg.mxu0
  %v307 = vmax.f32 %v289, 0.0
  %v308 = vmax.f32 %v291, 0.0
  %v309 = vmax.f32 %v293, 0.0
  %v310 = vmax.f32 %v295, 0.0
  %v311 = vmax.f32 %v299, 0.0
  %v312 = vmax.f32 %v301, 0.0
  %v313 = vmax.f32 %v303, 0.0
  %v314 = vmax.f32 %v305, 0.0
  %v315 = vpack.c.bf16 %v309, %v307
  %v316 = vpack.c.bf16 %v310, %v308
  %v317 = vpack.c.bf16 %v313, %v311
  %v318 = vpack.c.bf16 %v314, %v312
  %v323 = vunpack.c.l.b16 %v315
  %v324 = vunpack.c.l.b16 %v316
  %v325 = vunpack.c.h.b16 %v315
  %v326 = vunpack.c.h.b16 %v316
  %v327 = vunpack.c.l.b16 %v317
  %v328 = vunpack.c.l.b16 %v318
  %v329 = vunpack.c.h.b16 %v317
  %v330 = vunpack.c.h.b16 %v318
  %v331 = vpack.c.b16 %v324, %v323
  %v332 = vpack.c.b16 %v326, %v325
  %v333 = vpack.c.b16 %v328, %v327
  %v334 = vpack.c.b16 %v330, %v329
  %339 = vst [vmem:[%s3] sm:$0xff] %v331
  %340 = vst [vmem:[%s3 + $0x8] sm:$0xff] %v332
  %341 = vst [vmem:[%s3 + $0x10] sm:$0xff] %v333
  %342 = vst [vmem:[%s3 + $0x18] sm:$0xff] %v334
  // Predicated region
  $region14: #{_lambda_.4} parent=0 // pred_check
    _
  $region15: #{_lambda_.4} parent=0 // pred_check_branch
    %344 = sbr.rel (0) target = $region17
  $region16: #{_lambda_.4} parent=0 // pred_region
    _
  $region17: #{_lambda_.4} parent=0 // pred_fallthru
    _
  // Predicated region
  $region18: #{_lambda_.4} parent=0 // pred_check
    _
  $region19: #{_lambda_.4} parent=0 // pred_check_branch
    %346 = sbr.rel (0) target = $region21
  $region20: #{_lambda_.4} parent=0 // pred_region
    _
  $region21: #{_lambda_.4} parent=0 // pred_fallthru
    _

// kernel: _lambda_.5
$region0: #{_lambda_.5}
  #allocation0 [shape = 'u32[]', space=smem, size = 0x4, offset = 0x4, fixed_abs, tag = 'smem constant byte address 0x4 - core index']
  #allocation1 [shape = 'u32[144,128]{1,0:T(1,128)}', space=vmem, size = 0x12000, scoped, tag = 'internal scratch']
  %s0 = inlined_call_operand.vmem [shape: bf16[64,512], index: 0, kind: input, shape index: {}]
  %s1 = inlined_call_operand.vmem [shape: f32[64,1], index: 1, kind: input, shape index: {}]
  %s2 = inlined_call_operand.vmem [shape: bf16[512,128], index: 2, kind: input, shape index: {}]
  %s3 = inlined_call_operand.vmem [shape: bf16[64,128], index: 3, kind: output, shape index: {}]
  %s4 = sld [smem:[#allocation0]]
  $region22: #{_lambda_.5} parent=0
    _
  %s6 = ssub.s32 1, %s4
  %s7 = scalar_select 0, %s6, %s4
  // Predicated region
  $region2: #{_lambda_.5} parent=0 // pred_check
    _
  $region3: #{_lambda_.5} parent=0 // pred_check_branch
    %9 = sbr.rel (0) target = $region5
  $region4: #{_lambda_.5} parent=0 // pred_region
    _
  $region5: #{_lambda_.5} parent=0 // pred_fallthru
    _
  // Predicated region
  $region6: #{_lambda_.5} parent=0 // pred_check
    _
  $region7: #{_lambda_.5} parent=0 // pred_check_branch
    %11 = sbr.rel (0) target = $region9
  $region8: #{_lambda_.5} parent=0 // pred_region
    _
  $region9: #{_lambda_.5} parent=0 // pred_fallthru
    _
  // Predicated region
  $region10: #{_lambda_.5} parent=0 // pred_check
    _
  $region11: #{_lambda_.5} parent=0 // pred_check_branch
    %13 = sbr.rel (0) target = $region13
  $region12: #{_lambda_.5} parent=0 // pred_region
    _
  $region13: #{_lambda_.5} parent=0 // pred_fallthru
    _
  %v15 = vld [vmem:[%s0] sm:$0xff]
  %v16 = vld [vmem:[%s0 + $0x8] sm:$0xff]
  %v17 = vld [vmem:[%s0 + $0x10] sm:$0xff]
  %v18 = vld [vmem:[%s0 + $0x18] sm:$0xff]
  %v19 = vld [vmem:[%s0 + $0x20] sm:$0xff]
  %v20 = vld [vmem:[%s0 + $0x28] sm:$0xff]
  %v21 = vld [vmem:[%s0 + $0x30] sm:$0xff]
  %v22 = vld [vmem:[%s0 + $0x38] sm:$0xff]
  %v23 = vld [vmem:[%s0 + $0x40] sm:$0xff]
  %v24 = vld [vmem:[%s0 + $0x48] sm:$0xff]
  %v25 = vld [vmem:[%s0 + $0x50] sm:$0xff]
  %v26 = vld [vmem:[%s0 + $0x58] sm:$0xff]
  %v27 = vld [vmem:[%s0 + $0x60] sm:$0xff]
  %v28 = vld [vmem:[%s0 + $0x68] sm:$0xff]
  %v29 = vld [vmem:[%s0 + $0x70] sm:$0xff]
  %v30 = vld [vmem:[%s0 + $0x78] sm:$0xff]
  %v31 = vld [vmem:[%s2] sm:$0xf]
  %v32 = vld [vmem:[%s2 + $0x4] sm:$0xf]
  %v33 = vld [vmem:[%s2 + $0x8] sm:$0xf]
  %v34 = vld [vmem:[%s2 + $0xc] sm:$0xf]
  %v35 = vld [vmem:[%s2 + $0x10] sm:$0xf]
  %v36 = vld [vmem:[%s2 + $0x14] sm:$0xf]
  %v37 = vld [vmem:[%s2 + $0x18] sm:$0xf]
  %v38 = vld [vmem:[%s2 + $0x1c] sm:$0xf]
  %v39 = vld [vmem:[%s2 + $0x20] sm:$0xf]
  %v40 = vld [vmem:[%s2 + $0x24] sm:$0xf]
  %v41 = vld [vmem:[%s2 + $0x28] sm:$0xf]
  %v42 = vld [vmem:[%s2 + $0x2c] sm:$0xf]
  %v43 = vld [vmem:[%s2 + $0x30] sm:$0xf]
  %v44 = vld [vmem:[%s2 + $0x34] sm:$0xf]
  %v45 = vld [vmem:[%s2 + $0x38] sm:$0xf]
  %v46 = vld [vmem:[%s2 + $0x3c] sm:$0xf]
  %v47 = vld [vmem:[%s2 + $0x40] sm:$0xf]
  %v48 = vld [vmem:[%s2 + $0x44] sm:$0xf]
  %v49 = vld [vmem:[%s2 + $0x48] sm:$0xf]
  %v50 = vld [vmem:[%s2 + $0x4c] sm:$0xf]
  %v51 = vld [vmem:[%s2 + $0x50] sm:$0xf]
  %v52 = vld [vmem:[%s2 + $0x54] sm:$0xf]
  %v53 = vld [vmem:[%s2 + $0x58] sm:$0xf]
  %v54 = vld [vmem:[%s2 + $0x5c] sm:$0xf]
  %v55 = vld [vmem:[%s2 + $0x60] sm:$0xf]
  %v56 = vld [vmem:[%s2 + $0x64] sm:$0xf]
  %v57 = vld [vmem:[%s2 + $0x68] sm:$0xf]
  %v58 = vld [vmem:[%s2 + $0x6c] sm:$0xf]
  %v59 = vld [vmem:[%s2 + $0x70] sm:$0xf]
  %v60 = vld [vmem:[%s2 + $0x74] sm:$0xf]
  %v61 = vld [vmem:[%s2 + $0x78] sm:$0xf]
  %v62 = vld [vmem:[%s2 + $0x7c] sm:$0xf]
  %v63 = vld [vmem:[%s2 + $0x80] sm:$0xf]
  %v64 = vld [vmem:[%s2 + $0x84] sm:$0xf]
  %v65 = vld [vmem:[%s2 + $0x88] sm:$0xf]
  %v66 = vld [vmem:[%s2 + $0x8c] sm:$0xf]
  %v67 = vld [vmem:[%s2 + $0x90] sm:$0xf]
  %v68 = vld [vmem:[%s2 + $0x94] sm:$0xf]
  %v69 = vld [vmem:[%s2 + $0x98] sm:$0xf]
  %v70 = vld [vmem:[%s2 + $0x9c] sm:$0xf]
  %v71 = vld [vmem:[%s2 + $0xa0] sm:$0xf]
  %v72 = vld [vmem:[%s2 + $0xa4] sm:$0xf]
  %v73 = vld [vmem:[%s2 + $0xa8] sm:$0xf]
  %v74 = vld [vmem:[%s2 + $0xac] sm:$0xf]
  %v75 = vld [vmem:[%s2 + $0xb0] sm:$0xf]
  %v76 = vld [vmem:[%s2 + $0xb4] sm:$0xf]
  %v77 = vld [vmem:[%s2 + $0xb8] sm:$0xf]
  %v78 = vld [vmem:[%s2 + $0xbc] sm:$0xf]
  %v79 = vld [vmem:[%s2 + $0xc0] sm:$0xf]
  %v80 = vld [vmem:[%s2 + $0xc4] sm:$0xf]
  %v81 = vld [vmem:[%s2 + $0xc8] sm:$0xf]
  %v82 = vld [vmem:[%s2 + $0xcc] sm:$0xf]
  %v83 = vld [vmem:[%s2 + $0xd0] sm:$0xf]
  %v84 = vld [vmem:[%s2 + $0xd4] sm:$0xf]
  %v85 = vld [vmem:[%s2 + $0xd8] sm:$0xf]
  %v86 = vld [vmem:[%s2 + $0xdc] sm:$0xf]
  %v87 = vld [vmem:[%s2 + $0xe0] sm:$0xf]
  %v88 = vld [vmem:[%s2 + $0xe4] sm:$0xf]
  %v89 = vld [vmem:[%s2 + $0xe8] sm:$0xf]
  %v90 = vld [vmem:[%s2 + $0xec] sm:$0xf]
  %v91 = vld [vmem:[%s2 + $0xf0] sm:$0xf]
  %v92 = vld [vmem:[%s2 + $0xf4] sm:$0xf]
  %v93 = vld [vmem:[%s2 + $0xf8] sm:$0xf]
  %v94 = vld [vmem:[%s2 + $0xfc] sm:$0xf]
  %v95 = vld [vmem:[%s1] sm:$0xff]
  %v96 = vld [vmem:[%s1 + $0x8] sm:$0xff]
  %v97 = vld [vmem:[%s1 + $0x10] sm:$0xff]
  %v98 = vld [vmem:[%s1 + $0x18] sm:$0xff]
  %v99 = vld [vmem:[%s1 + $0x20] sm:$0xff]
  %v100 = vld [vmem:[%s1 + $0x28] sm:$0xff]
  %v101 = vld [vmem:[%s1 + $0x30] sm:$0xff]
  %v102 = vld [vmem:[%s1 + $0x38] sm:$0xff]
  %104 = vset.pattern.permute.xlu0 0
  %105 = vperm.xlu0 %104, %v95
  %v106 = vpop.permute.xlu0 %105
  %109 = vset.pattern.permute.xlu0 0
  %110 = vperm.xlu0 %109, %v96
  %v111 = vpop.permute.xlu0 %110
  %114 = vset.pattern.permute.xlu0 0
  %115 = vperm.xlu0 %114, %v97
  %v116 = vpop.permute.xlu0 %115
  %119 = vset.pattern.permute.xlu0 0
  %120 = vperm.xlu0 %119, %v98
  %v121 = vpop.permute.xlu0 %120
  %124 = vset.pattern.permute.xlu0 0
  %125 = vperm.xlu0 %124, %v99
  %v126 = vpop.permute.xlu0 %125
  %129 = vset.pattern.permute.xlu0 0
  %130 = vperm.xlu0 %129, %v100
  %v131 = vpop.permute.xlu0 %130
  %134 = vset.pattern.permute.xlu0 0
  %135 = vperm.xlu0 %134, %v101
  %v136 = vpop.permute.xlu0 %135
  %139 = vset.pattern.permute.xlu0 0
  %140 = vperm.xlu0 %139, %v102
  %v141 = vpop.permute.xlu0 %140
  %v159 = vunpack.c.l.b16 %v15
  %v160 = vunpack.c.h.b16 %v15
  %v161 = vunpack.c.l.b16 %v16
  %v162 = vunpack.c.h.b16 %v16
  %v163 = vunpack.c.l.b16 %v17
  %v164 = vunpack.c.h.b16 %v17
  %v165 = vunpack.c.l.b16 %v18
  %v166 = vunpack.c.h.b16 %v18
  %v167 = vunpack.c.l.b16 %v19
  %v168 = vunpack.c.h.b16 %v19
  %v169 = vunpack.c.l.b16 %v20
  %v170 = vunpack.c.h.b16 %v20
  %v171 = vunpack.c.l.b16 %v21
  %v172 = vunpack.c.h.b16 %v21
  %v173 = vunpack.c.l.b16 %v22
  %v174 = vunpack.c.h.b16 %v22
  %v175 = vunpack.c.l.b16 %v23
  %v176 = vunpack.c.h.b16 %v23
  %v177 = vunpack.c.l.b16 %v24
  %v178 = vunpack.c.h.b16 %v24
  %v179 = vunpack.c.l.b16 %v25
  %v180 = vunpack.c.h.b16 %v25
  %v181 = vunpack.c.l.b16 %v26
  %v182 = vunpack.c.h.b16 %v26
  %v183 = vunpack.c.l.b16 %v27
  %v184 = vunpack.c.h.b16 %v27
  %v185 = vunpack.c.l.b16 %v28
  %v186 = vunpack.c.h.b16 %v28
  %v187 = vunpack.c.l.b16 %v29
  %v188 = vunpack.c.h.b16 %v29
  %v189 = vunpack.c.l.b16 %v30
  %v190 = vunpack.c.h.b16 %v30
  %v191 = vpack.c.b16 %v163, %v159
  %v192 = vpack.c.b16 %v164, %v160
  %v193 = vpack.c.b16 %v165, %v161
  %v194 = vpack.c.b16 %v166, %v162
  %v195 = vpack.c.b16 %v171, %v167
  %v196 = vpack.c.b16 %v172, %v168
  %v197 = vpack.c.b16 %v173, %v169
  %v198 = vpack.c.b16 %v174, %v170
  %v199 = vpack.c.b16 %v179, %v175
  %v200 = vpack.c.b16 %v180, %v176
  %v201 = vpack.c.b16 %v181, %v177
  %v202 = vpack.c.b16 %v182, %v178
  %v203 = vpack.c.b16 %v187, %v183
  %v204 = vpack.c.b16 %v188, %v184
  %v205 = vpack.c.b16 %v189, %v185
  %v206 = vpack.c.b16 %v190, %v186
  %v287 = vunpack.c.l.b16 %v31
  %v288 = vunpack.c.l.b16 %v32
  %v289 = vunpack.c.l.b16 %v33
  %v290 = vunpack.c.l.b16 %v34
  %v291 = vunpack.c.l.b16 %v35
  %v292 = vunpack.c.l.b16 %v36
  %v293 = vunpack.c.l.b16 %v37
  %v294 = vunpack.c.l.b16 %v38
  %v295 = vunpack.c.l.b16 %v39
  %v296 = vunpack.c.l.b16 %v40
  %v297 = vunpack.c.l.b16 %v41
  %v298 = vunpack.c.l.b16 %v42
  %v299 = vunpack.c.l.b16 %v43
  %v300 = vunpack.c.l.b16 %v44
  %v301 = vunpack.c.l.b16 %v45
  %v302 = vunpack.c.l.b16 %v46
  %v303 = vunpack.c.l.b16 %v47
  %v304 = vunpack.c.l.b16 %v48
  %v305 = vunpack.c.l.b16 %v49
  %v306 = vunpack.c.l.b16 %v50
  %v307 = vunpack.c.l.b16 %v51
  %v308 = vunpack.c.l.b16 %v52
  %v309 = vunpack.c.l.b16 %v53
  %v310 = vunpack.c.l.b16 %v54
  %v311 = vunpack.c.l.b16 %v55
  %v312 = vunpack.c.l.b16 %v56
  %v313 = vunpack.c.l.b16 %v57
  %v314 = vunpack.c.l.b16 %v58
  %v315 = vunpack.c.l.b16 %v59
  %v316 = vunpack.c.l.b16 %v60
  %v317 = vunpack.c.l.b16 %v61
  %v318 = vunpack.c.l.b16 %v62
  %v319 = vunpack.c.l.b16 %v63
  %v320 = vunpack.c.l.b16 %v64
  %v321 = vunpack.c.l.b16 %v65
  %v322 = vunpack.c.l.b16 %v66
  %v323 = vunpack.c.l.b16 %v67
  %v324 = vunpack.c.l.b16 %v68
  %v325 = vunpack.c.l.b16 %v69
  %v326 = vunpack.c.l.b16 %v70
  %v327 = vunpack.c.l.b16 %v71
  %v328 = vunpack.c.l.b16 %v72
  %v329 = vunpack.c.l.b16 %v73
  %v330 = vunpack.c.l.b16 %v74
  %v331 = vunpack.c.l.b16 %v75
  %v332 = vunpack.c.l.b16 %v76
  %v333 = vunpack.c.l.b16 %v77
  %v334 = vunpack.c.l.b16 %v78
  %v335 = vunpack.c.l.b16 %v79
  %v336 = vunpack.c.l.b16 %v80
  %v337 = vunpack.c.l.b16 %v81
  %v338 = vunpack.c.l.b16 %v82
  %v339 = vunpack.c.l.b16 %v83
  %v340 = vunpack.c.l.b16 %v84
  %v341 = vunpack.c.l.b16 %v85
  %v342 = vunpack.c.l.b16 %v86
  %v343 = vunpack.c.l.b16 %v87
  %v344 = vunpack.c.l.b16 %v88
  %v345 = vunpack.c.l.b16 %v89
  %v346 = vunpack.c.l.b16 %v90
  %v347 = vunpack.c.l.b16 %v91
  %v348 = vunpack.c.l.b16 %v92
  %v349 = vunpack.c.l.b16 %v93
  %v350 = vunpack.c.l.b16 %v94
  %v351 = vpack.c.b16 %v288, %v287
  %v352 = vpack.c.b16 %v290, %v289
  %v353 = vpack.c.b16 %v292, %v291
  %v354 = vpack.c.b16 %v294, %v293
  %v355 = vpack.c.b16 %v296, %v295
  %v356 = vpack.c.b16 %v298, %v297
  %v357 = vpack.c.b16 %v300, %v299
  %v358 = vpack.c.b16 %v302, %v301
  %v359 = vpack.c.b16 %v304, %v303
  %v360 = vpack.c.b16 %v306, %v305
  %v361 = vpack.c.b16 %v308, %v307
  %v362 = vpack.c.b16 %v310, %v309
  %v363 = vpack.c.b16 %v312, %v311
  %v364 = vpack.c.b16 %v314, %v313
  %v365 = vpack.c.b16 %v316, %v315
  %v366 = vpack.c.b16 %v318, %v317
  %v367 = vpack.c.b16 %v320, %v319
  %v368 = vpack.c.b16 %v322, %v321
  %v369 = vpack.c.b16 %v324, %v323
  %v370 = vpack.c.b16 %v326, %v325
  %v371 = vpack.c.b16 %v328, %v327
  %v372 = vpack.c.b16 %v330, %v329
  %v373 = vpack.c.b16 %v332, %v331
  %v374 = vpack.c.b16 %v334, %v333
  %v375 = vpack.c.b16 %v336, %v335
  %v376 = vpack.c.b16 %v338, %v337
  %v377 = vpack.c.b16 %v340, %v339
  %v378 = vpack.c.b16 %v342, %v341
  %v379 = vpack.c.b16 %v344, %v343
  %v380 = vpack.c.b16 %v346, %v345
  %v381 = vpack.c.b16 %v348, %v347
  %v382 = vpack.c.b16 %v350, %v349
  %415 = vmatprep.subr.bf16.mxu0 0
  %416 = vmatpush1.bf16.msra.mxu0 %v351
  %417 = vmatprep.subr.bf16.mxu0 0
  %418 = vmatpush1.bf16.msra.mxu0 %v352
  %419 = vmatprep.subr.bf16.mxu0 0
  %420 = vmatpush1.bf16.msra.mxu0 %v353
  %421 = vmatprep.subr.bf16.mxu0 0
  %422 = vmatpush1.bf16.msra.mxu0 %v354
  %423 = vmatprep.subr.bf16.mxu0 0
  %424 = vmatpush1.bf16.msra.mxu0 %v355
  %425 = vmatprep.subr.bf16.mxu0 0
  %426 = vmatpush1.bf16.msra.mxu0 %v356
  %427 = vmatprep.subr.bf16.mxu0 0
  %428 = vmatpush1.bf16.msra.mxu0 %v357
  %429 = vmatprep.subr.bf16.mxu0 0
  %430 = vmatpush1.bf16.msra.mxu0 %v358
  %431 = vmatprep.subr.bf16.mxu0 0
  %432 = vmatpush1.bf16.msra.mxu0 %v359
  %433 = vmatprep.subr.bf16.mxu0 0
  %434 = vmatpush1.bf16.msra.mxu0 %v360
  %435 = vmatprep.subr.bf16.mxu0 0
  %436 = vmatpush1.bf16.msra.mxu0 %v361
  %437 = vmatprep.subr.bf16.mxu0 0
  %438 = vmatpush1.bf16.msra.mxu0 %v362
  %439 = vmatprep.subr.bf16.mxu0 0
  %440 = vmatpush1.bf16.msra.mxu0 %v363
  %441 = vmatprep.subr.bf16.mxu0 0
  %442 = vmatpush1.bf16.msra.mxu0 %v364
  %443 = vmatprep.subr.bf16.mxu0 0
  %444 = vmatpush1.bf16.msra.mxu0 %v365
  %445 = vmatprep.subr.bf16.mxu0 0
  %446 = vmatpush1.bf16.msra.mxu0 %v366
  %447 = vmatprep.mubr.bf16.mxu0 %v192
  %448 = vmatmul.mubr.bf16.gmra.mrb[0].mxu0 %v191
  %v449 = vpop.f32.mrb[0].mxu0
  %v450 = vadd.f32 %v106, %v449
  %v451 = vpop.f32.mrb[0].mxu0
  %v452 = vpop.f32.mrb[0].mxu0
  %v453 = vadd.f32 %v111, %v452
  %v454 = vpop.f32.mrb[0].mxu0
  %455 = vmatprep.mubr.bf16.mxu0 %v196
  %456 = vmatmul.mubr.bf16.gmra.mrb[0].mxu0 %v195
  %v457 = vpop.f32.mrb[0].mxu0
  %v458 = vadd.f32 %v116, %v457
  %v459 = vpop.f32.mrb[0].mxu0
  %v460 = vpop.f32.mrb[0].mxu0
  %v461 = vadd.f32 %v121, %v460
  %v462 = vpop.f32.mrb[0].mxu0
  %463 = vmatprep.mubr.bf16.mxu0 %v200
  %464 = vmatmul.mubr.bf16.gmra.mrb[0].mxu0 %v199
  %v465 = vpop.f32.mrb[0].mxu0
  %v466 = vadd.f32 %v126, %v465
  %v467 = vpop.f32.mrb[0].mxu0
  %v468 = vpop.f32.mrb[0].mxu0
  %v469 = vadd.f32 %v131, %v468
  %v470 = vpop.f32.mrb[0].mxu0
  %471 = vmatprep.mubr.bf16.mxu0 %v204
  %472 = vmatmul.mubr.bf16.gmra.mrb[0].mxu0 %v203
  %v473 = vpop.f32.mrb[0].mxu0
  %v474 = vadd.f32 %v136, %v473
  %v475 = vpop.f32.mrb[0].mxu0
  %v476 = vpop.f32.mrb[0].mxu0
  %v477 = vadd.f32 %v141, %v476
  %v478 = vpop.f32.mrb[0].mxu0
  %479 = vdwg.mxu0
  %480 = vmatprep.subr.bf16.mxu0 0
  %481 = vmatpush1.bf16.msra.mxu0 %v367
  %482 = vmatprep.subr.bf16.mxu0 0
  %483 = vmatpush1.bf16.msra.mxu0 %v368
  %484 = vmatprep.subr.bf16.mxu0 0
  %485 = vmatpush1.bf16.msra.mxu0 %v369
  %486 = vmatprep.subr.bf16.mxu0 0
  %487 = vmatpush1.bf16.msra.mxu0 %v370
  %488 = vmatprep.subr.bf16.mxu0 0
  %489 = vmatpush1.bf16.msra.mxu0 %v371
  %490 = vmatprep.subr.bf16.mxu0 0
  %491 = vmatpush1.bf16.msra.mxu0 %v372
  %492 = vmatprep.subr.bf16.mxu0 0
  %493 = vmatpush1.bf16.msra.mxu0 %v373
  %494 = vmatprep.subr.bf16.mxu0 0
  %495 = vmatpush1.bf16.msra.mxu0 %v374
  %496 = vmatprep.subr.bf16.mxu0 0
  %497 = vmatpush1.bf16.msra.mxu0 %v375
  %498 = vmatprep.subr.bf16.mxu0 0
  %499 = vmatpush1.bf16.msra.mxu0 %v376
  %500 = vmatprep.subr.bf16.mxu0 0
  %501 = vmatpush1.bf16.msra.mxu0 %v377
  %502 = vmatprep.subr.bf16.mxu0 0
  %503 = vmatpush1.bf16.msra.mxu0 %v378
  %504 = vmatprep.subr.bf16.mxu0 0
  %505 = vmatpush1.bf16.msra.mxu0 %v379
  %506 = vmatprep.subr.bf16.mxu0 0
  %507 = vmatpush1.bf16.msra.mxu0 %v380
  %508 = vmatprep.subr.bf16.mxu0 0
  %509 = vmatpush1.bf16.msra.mxu0 %v381
  %510 = vmatprep.subr.bf16.mxu0 0
  %511 = vmatpush1.bf16.msra.mxu0 %v382
  %512 = vmatprep.mubr.bf16.mxu0 %v194
  %513 = vmatmul.mubr.bf16.gmra.mrb[0].mxu0 %v193
  %v514 = vpop.f32.mrb[0].mxu0
  %v515 = vadd.f32 %v450, %v514
  %v516 = vpop.f32.mrb[0].mxu0
  %v517 = vpop.f32.mrb[0].mxu0
  %v518 = vadd.f32 %v453, %v517
  %v519 = vpop.f32.mrb[0].mxu0
  %520 = vmatprep.mubr.bf16.mxu0 %v198
  %521 = vmatmul.mubr.bf16.gmra.mrb[0].mxu0 %v197
  %v522 = vpop.f32.mrb[0].mxu0
  %v523 = vadd.f32 %v458, %v522
  %v524 = vpop.f32.mrb[0].mxu0
  %v525 = vpop.f32.mrb[0].mxu0
  %v526 = vadd.f32 %v461, %v525
  %v527 = vpop.f32.mrb[0].mxu0
  %528 = vmatprep.mubr.bf16.mxu0 %v202
  %529 = vmatmul.mubr.bf16.gmra.mrb[0].mxu0 %v201
  %v530 = vpop.f32.mrb[0].mxu0
  %v531 = vadd.f32 %v466, %v530
  %v532 = vpop.f32.mrb[0].mxu0
  %v533 = vpop.f32.mrb[0].mxu0
  %v534 = vadd.f32 %v469, %v533
  %v535 = vpop.f32.mrb[0].mxu0
  %536 = vmatprep.mubr.bf16.mxu0 %v206
  %537 = vmatmul.mubr.bf16.gmra.mrb[0].mxu0 %v205
  %v538 = vpop.f32.mrb[0].mxu0
  %v539 = vadd.f32 %v474, %v538
  %v540 = vpop.f32.mrb[0].mxu0
  %v541 = vpop.f32.mrb[0].mxu0
  %v542 = vadd.f32 %v477, %v541
  %v543 = vpop.f32.mrb[0].mxu0
  %544 = vdwg.mxu0
  %v545 = vmax.f32 %v515, 0.0
  %v546 = vmax.f32 %v518, 0.0
  %v547 = vmax.f32 %v523, 0.0
  %v548 = vmax.f32 %v526, 0.0
  %v549 = vmax.f32 %v531, 0.0
  %v550 = vmax.f32 %v534, 0.0
  %v551 = vmax.f32 %v539, 0.0
  %v552 = vmax.f32 %v542, 0.0
  %v553 = vpack.c.bf16 %v546, %v545
  %v554 = vpack.c.bf16 %v548, %v547
  %v555 = vpack.c.bf16 %v550, %v549
  %v556 = vpack.c.bf16 %v552, %v551
  %v561 = vunpack.c.l.b16 %v553
  %v562 = vunpack.c.h.b16 %v553
  %v563 = vunpack.c.l.b16 %v554
  %v564 = vunpack.c.h.b16 %v554
  %v565 = vunpack.c.l.b16 %v555
  %v566 = vunpack.c.h.b16 %v555
  %v567 = vunpack.c.l.b16 %v556
  %v568 = vunpack.c.h.b16 %v556
  %v569 = vpack.c.b16 %v561, %v561
  %v570 = vpack.c.b16 %v562, %v562
  %v571 = vpack.c.b16 %v563, %v563
  %v572 = vpack.c.b16 %v564, %v564
  %v573 = vpack.c.b16 %v565, %v565
  %v574 = vpack.c.b16 %v566, %v566
  %v575 = vpack.c.b16 %v567, %v567
  %v576 = vpack.c.b16 %v568, %v568
  %585 = vst [vmem:[%s3] sm:$0xf] %v569
  %586 = vst [vmem:[%s3 + $0x4] sm:$0xf] %v570
  %587 = vst [vmem:[%s3 + $0x8] sm:$0xf] %v571
  %588 = vst [vmem:[%s3 + $0xc] sm:$0xf] %v572
  %589 = vst [vmem:[%s3 + $0x10] sm:$0xf] %v573
  %590 = vst [vmem:[%s3 + $0x14] sm:$0xf] %v574
  %591 = vst [vmem:[%s3 + $0x18] sm:$0xf] %v575
  %592 = vst [vmem:[%s3 + $0x1c] sm:$0xf] %v576
  // Predicated region
  $region14: #{_lambda_.5} parent=0 // pred_check
    _
  $region15: #{_lambda_.5} parent=0 // pred_check_branch
    %594 = sbr.rel (0) target = $region17
  $region16: #{_lambda_.5} parent=0 // pred_region
    _
  $region17: #{_lambda_.5} parent=0 // pred_fallthru
    _
  // Predicated region
  $region18: #{_lambda_.5} parent=0 // pred_check
    _
  $region19: #{_lambda_.5} parent=0 // pred_check_branch
    %596 = sbr.rel (0) target = $region21
  $region20: #{_lambda_.5} parent=0 // pred_region
    _
  $region21: #{_lambda_.5} parent=0 // pred_fallthru
    _

// kernel: _lambda_.6
$region0: #{_lambda_.6}
  #allocation0 [shape = 'u32[]', space=smem, size = 0x4, offset = 0x4, fixed_abs, tag = 'smem constant byte address 0x4 - core index']
  #allocation1 [shape = 'u32[144,128]{1,0:T(1,128)}', space=vmem, size = 0x12000, scoped, tag = 'internal scratch']
  %s0 = inlined_call_operand.vmem [shape: bf16[64,576], index: 0, kind: input, shape index: {}]
  %s1 = inlined_call_operand.vmem [shape: f32[64,1], index: 1, kind: input, shape index: {}]
  %s2 = inlined_call_operand.vmem [shape: bf16[576,128], index: 2, kind: input, shape index: {}]
  %s3 = inlined_call_operand.vmem [shape: bf16[64,128], index: 3, kind: output, shape index: {}]
  %s4 = sld [smem:[#allocation0]]
  $region22: #{_lambda_.6} parent=0
    _
  %s6 = ssub.s32 1, %s4
  %s7 = scalar_select 0, %s6, %s4
  // Predicated region
  $region2: #{_lambda_.6} parent=0 // pred_check
    _
  $region3: #{_lambda_.6} parent=0 // pred_check_branch
    %9 = sbr.rel (0) target = $region5
  $region4: #{_lambda_.6} parent=0 // pred_region
    _
  $region5: #{_lambda_.6} parent=0 // pred_fallthru
    _
  // Predicated region
  $region6: #{_lambda_.6} parent=0 // pred_check
    _
  $region7: #{_lambda_.6} parent=0 // pred_check_branch
    %11 = sbr.rel (0) target = $region9
  $region8: #{_lambda_.6} parent=0 // pred_region
    _
  $region9: #{_lambda_.6} parent=0 // pred_fallthru
    _
  // Predicated region
  $region10: #{_lambda_.6} parent=0 // pred_check
    _
  $region11: #{_lambda_.6} parent=0 // pred_check_branch
    %13 = sbr.rel (0) target = $region13
  $region12: #{_lambda_.6} parent=0 // pred_region
    _
  $region13: #{_lambda_.6} parent=0 // pred_fallthru
    _
  %v15 = vld [vmem:[%s0] sm:$0xff]
  %v16 = vld [vmem:[%s0 + $0x8] sm:$0xff]
  %v17 = vld [vmem:[%s0 + $0x10] sm:$0xf]
  %v18 = vld [vmem:[%s0 + $0x14] sm:$0xff]
  %v19 = vld [vmem:[%s0 + $0x1c] sm:$0xff]
  %v20 = vld [vmem:[%s0 + $0x24] sm:$0xf]
  %v21 = vld [vmem:[%s0 + $0x28] sm:$0xff]
  %v22 = vld [vmem:[%s0 + $0x30] sm:$0xff]
  %v23 = vld [vmem:[%s0 + $0x38] sm:$0xf]
  %v24 = vld [vmem:[%s0 + $0x3c] sm:$0xff]
  %v25 = vld [vmem:[%s0 + $0x44] sm:$0xff]
  %v26 = vld [vmem:[%s0 + $0x4c] sm:$0xf]
  %v27 = vld [vmem:[%s0 + $0x50] sm:$0xff]
  %v28 = vld [vmem:[%s0 + $0x58] sm:$0xff]
  %v29 = vld [vmem:[%s0 + $0x60] sm:$0xf]
  %v30 = vld [vmem:[%s0 + $0x64] sm:$0xff]
  %v31 = vld [vmem:[%s0 + $0x6c] sm:$0xff]
  %v32 = vld [vmem:[%s0 + $0x74] sm:$0xf]
  %v33 = vld [vmem:[%s0 + $0x78] sm:$0xff]
  %v34 = vld [vmem:[%s0 + $0x80] sm:$0xff]
  %v35 = vld [vmem:[%s0 + $0x88] sm:$0xf]
  %v36 = vld [vmem:[%s0 + $0x8c] sm:$0xff]
  %v37 = vld [vmem:[%s0 + $0x94] sm:$0xff]
  %v38 = vld [vmem:[%s0 + $0x9c] sm:$0xf]
  %v39 = vld [vmem:[%s2] sm:$0xf]
  %v40 = vld [vmem:[%s2 + $0x4] sm:$0xf]
  %v41 = vld [vmem:[%s2 + $0x8] sm:$0xf]
  %v42 = vld [vmem:[%s2 + $0xc] sm:$0xf]
  %v43 = vld [vmem:[%s2 + $0x10] sm:$0xf]
  %v44 = vld [vmem:[%s2 + $0x14] sm:$0xf]
  %v45 = vld [vmem:[%s2 + $0x18] sm:$0xf]
  %v46 = vld [vmem:[%s2 + $0x1c] sm:$0xf]
  %v47 = vld [vmem:[%s2 + $0x20] sm:$0xf]
  %v48 = vld [vmem:[%s2 + $0x24] sm:$0xf]
  %v49 = vld [vmem:[%s2 + $0x28] sm:$0xf]
  %v50 = vld [vmem:[%s2 + $0x2c] sm:$0xf]
  %v51 = vld [vmem:[%s2 + $0x30] sm:$0xf]
  %v52 = vld [vmem:[%s2 + $0x34] sm:$0xf]
  %v53 = vld [vmem:[%s2 + $0x38] sm:$0xf]
  %v54 = vld [vmem:[%s2 + $0x3c] sm:$0xf]
  %v55 = vld [vmem:[%s2 + $0x40] sm:$0xf]
  %v56 = vld [vmem:[%s2 + $0x44] sm:$0xf]
  %v57 = vld [vmem:[%s2 + $0x48] sm:$0xf]
  %v58 = vld [vmem:[%s2 + $0x4c] sm:$0xf]
  %v59 = vld [vmem:[%s2 + $0x50] sm:$0xf]
  %v60 = vld [vmem:[%s2 + $0x54] sm:$0xf]
  %v61 = vld [vmem:[%s2 + $0x58] sm:$0xf]
  %v62 = vld [vmem:[%s2 + $0x5c] sm:$0xf]
  %v63 = vld [vmem:[%s2 + $0x60] sm:$0xf]
  %v64 = vld [vmem:[%s2 + $0x64] sm:$0xf]
  %v65 = vld [vmem:[%s2 + $0x68] sm:$0xf]
  %v66 = vld [vmem:[%s2 + $0x6c] sm:$0xf]
  %v67 = vld [vmem:[%s2 + $0x70] sm:$0xf]
  %v68 = vld [vmem:[%s2 + $0x74] sm:$0xf]
  %v69 = vld [vmem:[%s2 + $0x78] sm:$0xf]
  %v70 = vld [vmem:[%s2 + $0x7c] sm:$0xf]
  %v71 = vld [vmem:[%s2 + $0x80] sm:$0xf]
  %v72 = vld [vmem:[%s2 + $0x84] sm:$0xf]
  %v73 = vld [vmem:[%s2 + $0x88] sm:$0xf]
  %v74 = vld [vmem:[%s2 + $0x8c] sm:$0xf]
  %v75 = vld [vmem:[%s2 + $0x90] sm:$0xf]
  %v76 = vld [vmem:[%s2 + $0x94] sm:$0xf]
  %v77 = vld [vmem:[%s2 + $0x98] sm:$0xf]
  %v78 = vld [vmem:[%s2 + $0x9c] sm:$0xf]
  %v79 = vld [vmem:[%s2 + $0xa0] sm:$0xf]
  %v80 = vld [vmem:[%s2 + $0xa4] sm:$0xf]
  %v81 = vld [vmem:[%s2 + $0xa8] sm:$0xf]
  %v82 = vld [vmem:[%s2 + $0xac] sm:$0xf]
  %v83 = vld [vmem:[%s2 + $0xb0] sm:$0xf]
  %v84 = vld [vmem:[%s2 + $0xb4] sm:$0xf]
  %v85 = vld [vmem:[%s2 + $0xb8] sm:$0xf]
  %v86 = vld [vmem:[%s2 + $0xbc] sm:$0xf]
  %v87 = vld [vmem:[%s2 + $0xc0] sm:$0xf]
  %v88 = vld [vmem:[%s2 + $0xc4] sm:$0xf]
  %v89 = vld [vmem:[%s2 + $0xc8] sm:$0xf]
  %v90 = vld [vmem:[%s2 + $0xcc] sm:$0xf]
  %v91 = vld [vmem:[%s2 + $0xd0] sm:$0xf]
  %v92 = vld [vmem:[%s2 + $0xd4] sm:$0xf]
  %v93 = vld [vmem:[%s2 + $0xd8] sm:$0xf]
  %v94 = vld [vmem:[%s2 + $0xdc] sm:$0xf]
  %v95 = vld [vmem:[%s2 + $0xe0] sm:$0xf]
  %v96 = vld [vmem:[%s2 + $0xe4] sm:$0xf]
  %v97 = vld [vmem:[%s2 + $0xe8] sm:$0xf]
  %v98 = vld [vmem:[%s2 + $0xec] sm:$0xf]
  %v99 = vld [vmem:[%s2 + $0xf0] sm:$0xf]
  %v100 = vld [vmem:[%s2 + $0xf4] sm:$0xf]
  %v101 = vld [vmem:[%s2 + $0xf8] sm:$0xf]
  %v102 = vld [vmem:[%s2 + $0xfc] sm:$0xf]
  %v103 = vld [vmem:[%s2 + $0x100] sm:$0xf]
  %v104 = vld [vmem:[%s2 + $0x104] sm:$0xf]
  %v105 = vld [vmem:[%s2 + $0x108] sm:$0xf]
  %v106 = vld [vmem:[%s2 + $0x10c] sm:$0xf]
  %v107 = vld [vmem:[%s2 + $0x110] sm:$0xf]
  %v108 = vld [vmem:[%s2 + $0x114] sm:$0xf]
  %v109 = vld [vmem:[%s2 + $0x118] sm:$0xf]
  %v110 = vld [vmem:[%s2 + $0x11c] sm:$0xf]
  %v111 = vld [vmem:[%s1] sm:$0xff]
  %v112 = vld [vmem:[%s1 + $0x8] sm:$0xff]
  %v113 = vld [vmem:[%s1 + $0x10] sm:$0xff]
  %v114 = vld [vmem:[%s1 + $0x18] sm:$0xff]
  %v115 = vld [vmem:[%s1 + $0x20] sm:$0xff]
  %v116 = vld [vmem:[%s1 + $0x28] sm:$0xff]
  %v117 = vld [vmem:[%s1 + $0x30] sm:$0xff]
  %v118 = vld [vmem:[%s1 + $0x38] sm:$0xff]
  %120 = vset.pattern.permute.xlu0 0
  %121 = vperm.xlu0 %120, %v111
  %v122 = vpop.permute.xlu0 %121
  %125 = vset.pattern.permute.xlu0 0
  %126 = vperm.xlu0 %125, %v112
  %v127 = vpop.permute.xlu0 %126
  %130 = vset.pattern.permute.xlu0 0
  %131 = vperm.xlu0 %130, %v113
  %v132 = vpop.permute.xlu0 %131
  %135 = vset.pattern.permute.xlu0 0
  %136 = vperm.xlu0 %135, %v114
  %v137 = vpop.permute.xlu0 %136
  %140 = vset.pattern.permute.xlu0 0
  %141 = vperm.xlu0 %140, %v115
  %v142 = vpop.permute.xlu0 %141
  %145 = vset.pattern.permute.xlu0 0
  %146 = vperm.xlu0 %145, %v116
  %v147 = vpop.permute.xlu0 %146
  %150 = vset.pattern.permute.xlu0 0
  %151 = vperm.xlu0 %150, %v117
  %v152 = vpop.permute.xlu0 %151
  %155 = vset.pattern.permute.xlu0 0
  %156 = vperm.xlu0 %155, %v118
  %v157 = vpop.permute.xlu0 %156
  %v183 = vunpack.c.l.b16 %v15
  %v184 = vunpack.c.h.b16 %v15
  %v185 = vunpack.c.l.b16 %v16
  %v186 = vunpack.c.h.b16 %v16
  %v187 = vunpack.c.l.b16 %v17
  %v188 = vunpack.c.l.b16 %v18
  %v189 = vunpack.c.h.b16 %v18
  %v190 = vunpack.c.l.b16 %v19
  %v191 = vunpack.c.h.b16 %v19
  %v192 = vunpack.c.l.b16 %v20
  %v193 = vunpack.c.l.b16 %v21
  %v194 = vunpack.c.h.b16 %v21
  %v195 = vunpack.c.l.b16 %v22
  %v196 = vunpack.c.h.b16 %v22
  %v197 = vunpack.c.l.b16 %v23
  %v198 = vunpack.c.l.b16 %v24
  %v199 = vunpack.c.h.b16 %v24
  %v200 = vunpack.c.l.b16 %v25
  %v201 = vunpack.c.h.b16 %v25
  %v202 = vunpack.c.l.b16 %v26
  %v203 = vunpack.c.l.b16 %v27
  %v204 = vunpack.c.h.b16 %v27
  %v205 = vunpack.c.l.b16 %v28
  %v206 = vunpack.c.h.b16 %v28
  %v207 = vunpack.c.l.b16 %v29
  %v208 = vunpack.c.l.b16 %v30
  %v209 = vunpack.c.h.b16 %v30
  %v210 = vunpack.c.l.b16 %v31
  %v211 = vunpack.c.h.b16 %v31
  %v212 = vunpack.c.l.b16 %v32
  %v213 = vunpack.c.l.b16 %v33
  %v214 = vunpack.c.h.b16 %v33
  %v215 = vunpack.c.l.b16 %v34
  %v216 = vunpack.c.h.b16 %v34
  %v217 = vunpack.c.l.b16 %v35
  %v218 = vunpack.c.l.b16 %v36
  %v219 = vunpack.c.h.b16 %v36
  %v220 = vunpack.c.l.b16 %v37
  %v221 = vunpack.c.h.b16 %v37
  %v222 = vunpack.c.l.b16 %v38
  %v223 = vpack.c.b16 %v188, %v183
  %v224 = vpack.c.b16 %v189, %v184
  %v225 = vpack.c.b16 %v190, %v185
  %v226 = vpack.c.b16 %v191, %v186
  %v227 = vpack.c.b16 %v192, %v187
  %v228 = vpack.c.b16 %v198, %v193
  %v229 = vpack.c.b16 %v199, %v194
  %v230 = vpack.c.b16 %v200, %v195
  %v231 = vpack.c.b16 %v201, %v196
  %v232 = vpack.c.b16 %v202, %v197
  %v233 = vpack.c.b16 %v208, %v203
  %v234 = vpack.c.b16 %v209, %v204
  %v235 = vpack.c.b16 %v210, %v205
  %v236 = vpack.c.b16 %v211, %v206
  %v237 = vpack.c.b16 %v212, %v207
  %v238 = vpack.c.b16 %v218, %v213
  %v239 = vpack.c.b16 %v219, %v214
  %v240 = vpack.c.b16 %v220, %v215
  %v241 = vpack.c.b16 %v221, %v216
  %v242 = vpack.c.b16 %v222, %v217
  %v331 = vunpack.c.l.b16 %v39
  %v332 = vunpack.c.l.b16 %v40
  %v333 = vunpack.c.l.b16 %v41
  %v334 = vunpack.c.l.b16 %v42
  %v335 = vunpack.c.l.b16 %v43
  %v336 = vunpack.c.l.b16 %v44
  %v337 = vunpack.c.l.b16 %v45
  %v338 = vunpack.c.l.b16 %v46
  %v339 = vunpack.c.l.b16 %v47
  %v340 = vunpack.c.l.b16 %v48
  %v341 = vunpack.c.l.b16 %v49
  %v342 = vunpack.c.l.b16 %v50
  %v343 = vunpack.c.l.b16 %v51
  %v344 = vunpack.c.l.b16 %v52
  %v345 = vunpack.c.l.b16 %v53
  %v346 = vunpack.c.l.b16 %v54
  %v347 = vunpack.c.l.b16 %v55
  %v348 = vunpack.c.l.b16 %v56
  %v349 = vunpack.c.l.b16 %v57
  %v350 = vunpack.c.l.b16 %v58
  %v351 = vunpack.c.l.b16 %v59
  %v352 = vunpack.c.l.b16 %v60
  %v353 = vunpack.c.l.b16 %v61
  %v354 = vunpack.c.l.b16 %v62
  %v355 = vunpack.c.l.b16 %v63
  %v356 = vunpack.c.l.b16 %v64
  %v357 = vunpack.c.l.b16 %v65
  %v358 = vunpack.c.l.b16 %v66
  %v359 = vunpack.c.l.b16 %v67
  %v360 = vunpack.c.l.b16 %v68
  %v361 = vunpack.c.l.b16 %v69
  %v362 = vunpack.c.l.b16 %v70
  %v363 = vunpack.c.l.b16 %v71
  %v364 = vunpack.c.l.b16 %v72
  %v365 = vunpack.c.l.b16 %v73
  %v366 = vunpack.c.l.b16 %v74
  %v367 = vunpack.c.l.b16 %v75
  %v368 = vunpack.c.l.b16 %v76
  %v369 = vunpack.c.l.b16 %v77
  %v370 = vunpack.c.l.b16 %v78
  %v371 = vunpack.c.l.b16 %v79
  %v372 = vunpack.c.l.b16 %v80
  %v373 = vunpack.c.l.b16 %v81
  %v374 = vunpack.c.l.b16 %v82
  %v375 = vunpack.c.l.b16 %v83
  %v376 = vunpack.c.l.b16 %v84
  %v377 = vunpack.c.l.b16 %v85
  %v378 = vunpack.c.l.b16 %v86
  %v379 = vunpack.c.l.b16 %v87
  %v380 = vunpack.c.l.b16 %v88
  %v381 = vunpack.c.l.b16 %v89
  %v382 = vunpack.c.l.b16 %v90
  %v383 = vunpack.c.l.b16 %v91
  %v384 = vunpack.c.l.b16 %v92
  %v385 = vunpack.c.l.b16 %v93
  %v386 = vunpack.c.l.b16 %v94
  %v387 = vunpack.c.l.b16 %v95
  %v388 = vunpack.c.l.b16 %v96
  %v389 = vunpack.c.l.b16 %v97
  %v390 = vunpack.c.l.b16 %v98
  %v391 = vunpack.c.l.b16 %v99
  %v392 = vunpack.c.l.b16 %v100
  %v393 = vunpack.c.l.b16 %v101
  %v394 = vunpack.c.l.b16 %v102
  %v395 = vunpack.c.l.b16 %v103
  %v396 = vunpack.c.l.b16 %v104
  %v397 = vunpack.c.l.b16 %v105
  %v398 = vunpack.c.l.b16 %v106
  %v399 = vunpack.c.l.b16 %v107
  %v400 = vunpack.c.l.b16 %v108
  %v401 = vunpack.c.l.b16 %v109
  %v402 = vunpack.c.l.b16 %v110
  %v403 = vpack.c.b16 %v332, %v331
  %v404 = vpack.c.b16 %v334, %v333
  %v405 = vpack.c.b16 %v336, %v335
  %v406 = vpack.c.b16 %v338, %v337
  %v407 = vpack.c.b16 %v340, %v339
  %v408 = vpack.c.b16 %v342, %v341
  %v409 = vpack.c.b16 %v344, %v343
  %v410 = vpack.c.b16 %v346, %v345
  %v411 = vpack.c.b16 %v348, %v347
  %v412 = vpack.c.b16 %v350, %v349
  %v413 = vpack.c.b16 %v352, %v351
  %v414 = vpack.c.b16 %v354, %v353
  %v415 = vpack.c.b16 %v356, %v355
  %v416 = vpack.c.b16 %v358, %v357
  %v417 = vpack.c.b16 %v360, %v359
  %v418 = vpack.c.b16 %v362, %v361
  %v419 = vpack.c.b16 %v364, %v363
  %v420 = vpack.c.b16 %v366, %v365
  %v421 = vpack.c.b16 %v368, %v367
  %v422 = vpack.c.b16 %v370, %v369
  %v423 = vpack.c.b16 %v372, %v371
  %v424 = vpack.c.b16 %v374, %v373
  %v425 = vpack.c.b16 %v376, %v375
  %v426 = vpack.c.b16 %v378, %v377
  %v427 = vpack.c.b16 %v380, %v379
  %v428 = vpack.c.b16 %v382, %v381
  %v429 = vpack.c.b16 %v384, %v383
  %v430 = vpack.c.b16 %v386, %v385
  %v431 = vpack.c.b16 %v388, %v387
  %v432 = vpack.c.b16 %v390, %v389
  %v433 = vpack.c.b16 %v392, %v391
  %v434 = vpack.c.b16 %v394, %v393
  %v435 = vpack.c.b16 %v396, %v395
  %v436 = vpack.c.b16 %v398, %v397
  %v437 = vpack.c.b16 %v400, %v399
  %v438 = vpack.c.b16 %v402, %v401
  %vm475 = vcmask 523264
  %v477 = vsel %vm475, %v227, 0
  %v480 = vsel %vm475, %v232, 0
  %v483 = vsel %vm475, %v237, 0
  %v486 = vsel %vm475, %v242, 0
  %488 = vmatprep.subr.bf16.mxu0 0
  %489 = vmatpush1.bf16.msra.mxu0 %v403
  %490 = vmatprep.subr.bf16.mxu0 0
  %491 = vmatpush1.bf16.msra.mxu0 %v404
  %492 = vmatprep.subr.bf16.mxu0 0
  %493 = vmatpush1.bf16.msra.mxu0 %v405
  %494 = vmatprep.subr.bf16.mxu0 0
  %495 = vmatpush1.bf16.msra.mxu0 %v406
  %496 = vmatprep.subr.bf16.mxu0 0
  %497 = vmatpush1.bf16.msra.mxu0 %v407
  %498 = vmatprep.subr.bf16.mxu0 0
  %499 = vmatpush1.bf16.msra.mxu0 %v408
  %500 = vmatprep.subr.bf16.mxu0 0
  %501 = vmatpush1.bf16.msra.mxu0 %v409
  %502 = vmatprep.subr.bf16.mxu0 0
  %503 = vmatpush1.bf16.msra.mxu0 %v410
  %504 = vmatprep.subr.bf16.mxu0 0
  %505 = vmatpush1.bf16.msra.mxu0 %v411
  %506 = vmatprep.subr.bf16.mxu0 0
  %507 = vmatpush1.bf16.msra.mxu0 %v412
  %508 = vmatprep.subr.bf16.mxu0 0
  %509 = vmatpush1.bf16.msra.mxu0 %v413
  %510 = vmatprep.subr.bf16.mxu0 0
  %511 = vmatpush1.bf16.msra.mxu0 %v414
  %512 = vmatprep.subr.bf16.mxu0 0
  %513 = vmatpush1.bf16.msra.mxu0 %v415
  %514 = vmatprep.subr.bf16.mxu0 0
  %515 = vmatpush1.bf16.msra.mxu0 %v416
  %516 = vmatprep.subr.bf16.mxu0 0
  %517 = vmatpush1.bf16.msra.mxu0 %v417
  %518 = vmatprep.subr.bf16.mxu0 0
  %519 = vmatpush1.bf16.msra.mxu0 %v418
  %520 = vmatprep.mubr.bf16.mxu0 %v224
  %521 = vmatmul.mubr.bf16.gmra.mrb[0].mxu0 %v223
  %v522 = vpop.f32.mrb[0].mxu0
  %v523 = vadd.f32 %v122, %v522
  %v524 = vpop.f32.mrb[0].mxu0
  %v525 = vpop.f32.mrb[0].mxu0
  %v526 = vadd.f32 %v127, %v525
  %v527 = vpop.f32.mrb[0].mxu0
  %528 = vmatprep.mubr.bf16.mxu0 %v229
  %529 = vmatmul.mubr.bf16.gmra.mrb[0].mxu0 %v228
  %v530 = vpop.f32.mrb[0].mxu0
  %v531 = vadd.f32 %v132, %v530
  %v532 = vpop.f32.mrb[0].mxu0
  %v533 = vpop.f32.mrb[0].mxu0
  %v534 = vadd.f32 %v137, %v533
  %v535 = vpop.f32.mrb[0].mxu0
  %536 = vmatprep.mubr.bf16.mxu0 %v234
  %537 = vmatmul.mubr.bf16.gmra.mrb[0].mxu0 %v233
  %v538 = vpop.f32.mrb[0].mxu0
  %v539 = vadd.f32 %v142, %v538
  %v540 = vpop.f32.mrb[0].mxu0
  %v541 = vpop.f32.mrb[0].mxu0
  %v542 = vadd.f32 %v147, %v541
  %v543 = vpop.f32.mrb[0].mxu0
  %544 = vmatprep.mubr.bf16.mxu0 %v239
  %545 = vmatmul.mubr.bf16.gmra.mrb[0].mxu0 %v238
  %v546 = vpop.f32.mrb[0].mxu0
  %v547 = vadd.f32 %v152, %v546
  %v548 = vpop.f32.mrb[0].mxu0
  %v549 = vpop.f32.mrb[0].mxu0
  %v550 = vadd.f32 %v157, %v549
  %v551 = vpop.f32.mrb[0].mxu0
  %552 = vdwg.mxu0
  %553 = vmatprep.subr.bf16.mxu0 0
  %554 = vmatpush1.bf16.msra.mxu0 %v419
  %555 = vmatprep.subr.bf16.mxu0 0
  %556 = vmatpush1.bf16.msra.mxu0 %v420
  %557 = vmatprep.subr.bf16.mxu0 0
  %558 = vmatpush1.bf16.msra.mxu0 %v421
  %559 = vmatprep.subr.bf16.mxu0 0
  %560 = vmatpush1.bf16.msra.mxu0 %v422
  %561 = vmatprep.subr.bf16.mxu0 0
  %562 = vmatpush1.bf16.msra.mxu0 %v423
  %563 = vmatprep.subr.bf16.mxu0 0
  %564 = vmatpush1.bf16.msra.mxu0 %v424
  %565 = vmatprep.subr.bf16.mxu0 0
  %566 = vmatpush1.bf16.msra.mxu0 %v425
  %567 = vmatprep.subr.bf16.mxu0 0
  %568 = vmatpush1.bf16.msra.mxu0 %v426
  %569 = vmatprep.subr.bf16.mxu0 0
  %570 = vmatpush1.bf16.msra.mxu0 %v427
  %571 = vmatprep.subr.bf16.mxu0 0
  %572 = vmatpush1.bf16.msra.mxu0 %v428
  %573 = vmatprep.subr.bf16.mxu0 0
  %574 = vmatpush1.bf16.msra.mxu0 %v429
  %575 = vmatprep.subr.bf16.mxu0 0
  %576 = vmatpush1.bf16.msra.mxu0 %v430
  %577 = vmatprep.subr.bf16.mxu0 0
  %578 = vmatpush1.bf16.msra.mxu0 %v431
  %579 = vmatprep.subr.bf16.mxu0 0
  %580 = vmatpush1.bf16.msra.mxu0 %v432
  %581 = vmatprep.subr.bf16.mxu0 0
  %582 = vmatpush1.bf16.msra.mxu0 %v433
  %583 = vmatprep.subr.bf16.mxu0 0
  %584 = vmatpush1.bf16.msra.mxu0 %v434
  %585 = vmatprep.mubr.bf16.mxu0 %v226
  %586 = vmatmul.mubr.bf16.gmra.mrb[0].mxu0 %v225
  %v587 = vpop.f32.mrb[0].mxu0
  %v588 = vadd.f32 %v523, %v587
  %v589 = vpop.f32.mrb[0].mxu0
  %v590 = vpop.f32.mrb[0].mxu0
  %v591 = vadd.f32 %v526, %v590
  %v592 = vpop.f32.mrb[0].mxu0
  %593 = vmatprep.mubr.bf16.mxu0 %v231
  %594 = vmatmul.mubr.bf16.gmra.mrb[0].mxu0 %v230
  %v595 = vpop.f32.mrb[0].mxu0
  %v596 = vadd.f32 %v531, %v595
  %v597 = vpop.f32.mrb[0].mxu0
  %v598 = vpop.f32.mrb[0].mxu0
  %v599 = vadd.f32 %v534, %v598
  %v600 = vpop.f32.mrb[0].mxu0
  %601 = vmatprep.mubr.bf16.mxu0 %v236
  %602 = vmatmul.mubr.bf16.gmra.mrb[0].mxu0 %v235
  %v603 = vpop.f32.mrb[0].mxu0
  %v604 = vadd.f32 %v539, %v603
  %v605 = vpop.f32.mrb[0].mxu0
  %v606 = vpop.f32.mrb[0].mxu0
  %v607 = vadd.f32 %v542, %v606
  %v608 = vpop.f32.mrb[0].mxu0
  %609 = vmatprep.mubr.bf16.mxu0 %v241
  %610 = vmatmul.mubr.bf16.gmra.mrb[0].mxu0 %v240
  %v611 = vpop.f32.mrb[0].mxu0
  %v612 = vadd.f32 %v547, %v611
  %v613 = vpop.f32.mrb[0].mxu0
  %v614 = vpop.f32.mrb[0].mxu0
  %v615 = vadd.f32 %v550, %v614
  %v616 = vpop.f32.mrb[0].mxu0
  %617 = vdwg.mxu0
  %618 = vmatprep.subr.bf16.mxu0 0
  %619 = vmatpush1.bf16.msra.mxu0 %v435
  %620 = vmatprep.subr.bf16.mxu0 0
  %621 = vmatpush1.bf16.msra.mxu0 %v436
  %622 = vmatprep.subr.bf16.mxu0 0
  %623 = vmatpush1.bf16.msra.mxu0 %v437
  %624 = vmatprep.subr.bf16.mxu0 0
  %625 = vmatpush1.bf16.msra.mxu0 %v438
  %626 = vmatprep.subr.bf16.mxu0 0
  %627 = vmatpush1.bf16.msra.mxu0 0
  %628 = vmatprep.subr.bf16.mxu0 0
  %629 = vmatpush1.bf16.msra.mxu0 0
  %630 = vmatprep.subr.bf16.mxu0 0
  %631 = vmatpush1.bf16.msra.mxu0 0
  %632 = vmatprep.subr.bf16.mxu0 0
  %633 = vmatpush1.bf16.msra.mxu0 0
  %634 = vmatprep.subr.bf16.mxu0 0
  %635 = vmatpush1.bf16.msra.mxu0 0
  %636 = vmatprep.subr.bf16.mxu0 0
  %637 = vmatpush1.bf16.msra.mxu0 0
  %638 = vmatprep.subr.bf16.mxu0 0
  %639 = vmatpush1.bf16.msra.mxu0 0
  %640 = vmatprep.subr.bf16.mxu0 0
  %641 = vmatpush1.bf16.msra.mxu0 0
  %642 = vmatprep.subr.bf16.mxu0 0
  %643 = vmatpush1.bf16.msra.mxu0 0
  %644 = vmatprep.subr.bf16.mxu0 0
  %645 = vmatpush1.bf16.msra.mxu0 0
  %646 = vmatprep.subr.bf16.mxu0 0
  %647 = vmatpush1.bf16.msra.mxu0 0
  %648 = vmatprep.subr.bf16.mxu0 0
  %649 = vmatpush1.bf16.msra.mxu0 0
  %650 = vmatprep.mubr.bf16.mxu0 0
  %651 = vmatmul.mubr.bf16.gmra.mrb[0].mxu0 %v477
  %v652 = vpop.f32.mrb[0].mxu0
  %v653 = vadd.f32 %v588, %v652
  %v654 = vpop.f32.mrb[0].mxu0
  %v655 = vpop.f32.mrb[0].mxu0
  %v656 = vadd.f32 %v591, %v655
  %v657 = vpop.f32.mrb[0].mxu0
  %658 = vmatprep.mubr.bf16.mxu0 0
  %659 = vmatmul.mubr.bf16.gmra.mrb[0].mxu0 %v480
  %v660 = vpop.f32.mrb[0].mxu0
  %v661 = vadd.f32 %v596, %v660
  %v662 = vpop.f32.mrb[0].mxu0
  %v663 = vpop.f32.mrb[0].mxu0
  %v664 = vadd.f32 %v599, %v663
  %v665 = vpop.f32.mrb[0].mxu0
  %666 = vmatprep.mubr.bf16.mxu0 0
  %667 = vmatmul.mubr.bf16.gmra.mrb[0].mxu0 %v483
  %v668 = vpop.f32.mrb[0].mxu0
  %v669 = vadd.f32 %v604, %v668
  %v670 = vpop.f32.mrb[0].mxu0
  %v671 = vpop.f32.mrb[0].mxu0
  %v672 = vadd.f32 %v607, %v671
  %v673 = vpop.f32.mrb[0].mxu0
  %674 = vmatprep.mubr.bf16.mxu0 0
  %675 = vmatmul.mubr.bf16.gmra.mrb[0].mxu0 %v486
  %v676 = vpop.f32.mrb[0].mxu0
  %v677 = vadd.f32 %v612, %v676
  %v678 = vpop.f32.mrb[0].mxu0
  %v679 = vpop.f32.mrb[0].mxu0
  %v680 = vadd.f32 %v615, %v679
  %v681 = vpop.f32.mrb[0].mxu0
  %682 = vdwg.mxu0
  %v683 = vmax.f32 %v653, 0.0
  %v684 = vmax.f32 %v656, 0.0
  %v685 = vmax.f32 %v661, 0.0
  %v686 = vmax.f32 %v664, 0.0
  %v687 = vmax.f32 %v669, 0.0
  %v688 = vmax.f32 %v672, 0.0
  %v689 = vmax.f32 %v677, 0.0
  %v690 = vmax.f32 %v680, 0.0
  %v691 = vpack.c.bf16 %v684, %v683
  %v692 = vpack.c.bf16 %v686, %v685
  %v693 = vpack.c.bf16 %v688, %v687
  %v694 = vpack.c.bf16 %v690, %v689
  %v699 = vunpack.c.l.b16 %v691
  %v700 = vunpack.c.h.b16 %v691
  %v701 = vunpack.c.l.b16 %v692
  %v702 = vunpack.c.h.b16 %v692
  %v703 = vunpack.c.l.b16 %v693
  %v704 = vunpack.c.h.b16 %v693
  %v705 = vunpack.c.l.b16 %v694
  %v706 = vunpack.c.h.b16 %v694
  %v707 = vpack.c.b16 %v699, %v699
  %v708 = vpack.c.b16 %v700, %v700
  %v709 = vpack.c.b16 %v701, %v701
  %v710 = vpack.c.b16 %v702, %v702
  %v711 = vpack.c.b16 %v703, %v703
  %v712 = vpack.c.b16 %v704, %v704
  %v713 = vpack.c.b16 %v705, %v705
  %v714 = vpack.c.b16 %v706, %v706
  %723 = vst [vmem:[%s3] sm:$0xf] %v707
  %724 = vst [vmem:[%s3 + $0x4] sm:$0xf] %v708
  %725 = vst [vmem:[%s3 + $0x8] sm:$0xf] %v709
  %726 = vst [vmem:[%s3 + $0xc] sm:$0xf] %v710
  %727 = vst [vmem:[%s3 + $0x10] sm:$0xf] %v711
  %728 = vst [vmem:[%s3 + $0x14] sm:$0xf] %v712
  %729 = vst [vmem:[%s3 + $0x18] sm:$0xf] %v713
  %730 = vst [vmem:[%s3 + $0x1c] sm:$0xf] %v714
  // Predicated region
  $region14: #{_lambda_.6} parent=0 // pred_check
    _
  $region15: #{_lambda_.6} parent=0 // pred_check_branch
    %732 = sbr.rel (0) target = $region17
  $region16: #{_lambda_.6} parent=0 // pred_region
    _
  $region17: #{_lambda_.6} parent=0 // pred_fallthru
    _
  // Predicated region
  $region18: #{_lambda_.6} parent=0 // pred_check
    _
  $region19: #{_lambda_.6} parent=0 // pred_check_branch
    %734 = sbr.rel (0) target = $region21
  $region20: #{_lambda_.6} parent=0 // pred_region
    _
  $region21: #{_lambda_.6} parent=0 // pred_fallthru
    _

// kernel: _lambda_.7
$region0: #{_lambda_.7}
  #allocation0 [shape = 'u32[]', space=smem, size = 0x4, offset = 0x4, fixed_abs, tag = 'smem constant byte address 0x4 - core index']
  #allocation1 [shape = 'u32[144,128]{1,0:T(1,128)}', space=vmem, size = 0x12000, scoped, tag = 'internal scratch']
  %s0 = inlined_call_operand.vmem [shape: bf16[8,256], index: 0, kind: input, shape index: {}]
  %s1 = inlined_call_operand.vmem [shape: bf16[256,512], index: 1, kind: input, shape index: {}]
  %s2 = inlined_call_operand.vmem [shape: f32[1,512], index: 2, kind: input, shape index: {}]
  %s3 = inlined_call_operand.vmem [shape: bf16[512,128], index: 3, kind: input, shape index: {}]
  %s4 = inlined_call_operand.vmem [shape: f32[1,128], index: 4, kind: input, shape index: {}]
  %s5 = inlined_call_operand.vmem [shape: f32[8,128], index: 5, kind: output, shape index: {}]
  %s6 = sld [smem:[#allocation0]]
  $region30: #{_lambda_.7} parent=0
    _
  %s8 = ssub.s32 1, %s6
  %s9 = scalar_select 0, %s8, %s6
  // Predicated region
  $region2: #{_lambda_.7} parent=0 // pred_check
    _
  $region3: #{_lambda_.7} parent=0 // pred_check_branch
    %11 = sbr.rel (0) target = $region5
  $region4: #{_lambda_.7} parent=0 // pred_region
    _
  $region5: #{_lambda_.7} parent=0 // pred_fallthru
    _
  // Predicated region
  $region6: #{_lambda_.7} parent=0 // pred_check
    _
  $region7: #{_lambda_.7} parent=0 // pred_check_branch
    %13 = sbr.rel (0) target = $region9
  $region8: #{_lambda_.7} parent=0 // pred_region
    _
  $region9: #{_lambda_.7} parent=0 // pred_fallthru
    _
  // Predicated region
  $region10: #{_lambda_.7} parent=0 // pred_check
    _
  $region11: #{_lambda_.7} parent=0 // pred_check_branch
    %15 = sbr.rel (0) target = $region13
  $region12: #{_lambda_.7} parent=0 // pred_region
    _
  $region13: #{_lambda_.7} parent=0 // pred_fallthru
    _
  // Predicated region
  $region14: #{_lambda_.7} parent=0 // pred_check
    _
  $region15: #{_lambda_.7} parent=0 // pred_check_branch
    %17 = sbr.rel (0) target = $region17
  $region16: #{_lambda_.7} parent=0 // pred_region
    _
  $region17: #{_lambda_.7} parent=0 // pred_fallthru
    _
  // Predicated region
  $region18: #{_lambda_.7} parent=0 // pred_check
    _
  $region19: #{_lambda_.7} parent=0 // pred_check_branch
    %19 = sbr.rel (0) target = $region21
  $region20: #{_lambda_.7} parent=0 // pred_region
    _
  $region21: #{_lambda_.7} parent=0 // pred_fallthru
    _
  %v21 = vld [vmem:[%s0] sm:$0xff]
  %v22 = vld [vmem:[%s1] sm:$0xff]
  %v23 = vld [vmem:[%s1 + $0x8] sm:$0xff]
  %v24 = vld [vmem:[%s1 + $0x10] sm:$0xff]
  %v25 = vld [vmem:[%s1 + $0x18] sm:$0xff]
  %v26 = vld [vmem:[%s1 + $0x20] sm:$0xff]
  %v27 = vld [vmem:[%s1 + $0x28] sm:$0xff]
  %v28 = vld [vmem:[%s1 + $0x30] sm:$0xff]
  %v29 = vld [vmem:[%s1 + $0x38] sm:$0xff]
  %v30 = vld [vmem:[%s1 + $0x40] sm:$0xff]
  %v31 = vld [vmem:[%s1 + $0x48] sm:$0xff]
  %v32 = vld [vmem:[%s1 + $0x50] sm:$0xff]
  %v33 = vld [vmem:[%s1 + $0x58] sm:$0xff]
  %v34 = vld [vmem:[%s1 + $0x60] sm:$0xff]
  %v35 = vld [vmem:[%s1 + $0x68] sm:$0xff]
  %v36 = vld [vmem:[%s1 + $0x70] sm:$0xff]
  %v37 = vld [vmem:[%s1 + $0x78] sm:$0xff]
  %v38 = vld [vmem:[%s1 + $0x80] sm:$0xff]
  %v39 = vld [vmem:[%s1 + $0x88] sm:$0xff]
  %v40 = vld [vmem:[%s1 + $0x90] sm:$0xff]
  %v41 = vld [vmem:[%s1 + $0x98] sm:$0xff]
  %v42 = vld [vmem:[%s1 + $0xa0] sm:$0xff]
  %v43 = vld [vmem:[%s1 + $0xa8] sm:$0xff]
  %v44 = vld [vmem:[%s1 + $0xb0] sm:$0xff]
  %v45 = vld [vmem:[%s1 + $0xb8] sm:$0xff]
  %v46 = vld [vmem:[%s1 + $0xc0] sm:$0xff]
  %v47 = vld [vmem:[%s1 + $0xc8] sm:$0xff]
  %v48 = vld [vmem:[%s1 + $0xd0] sm:$0xff]
  %v49 = vld [vmem:[%s1 + $0xd8] sm:$0xff]
  %v50 = vld [vmem:[%s1 + $0xe0] sm:$0xff]
  %v51 = vld [vmem:[%s1 + $0xe8] sm:$0xff]
  %v52 = vld [vmem:[%s1 + $0xf0] sm:$0xff]
  %v53 = vld [vmem:[%s1 + $0xf8] sm:$0xff]
  %v54 = vld [vmem:[%s1 + $0x100] sm:$0xff]
  %v55 = vld [vmem:[%s1 + $0x108] sm:$0xff]
  %v56 = vld [vmem:[%s1 + $0x110] sm:$0xff]
  %v57 = vld [vmem:[%s1 + $0x118] sm:$0xff]
  %v58 = vld [vmem:[%s1 + $0x120] sm:$0xff]
  %v59 = vld [vmem:[%s1 + $0x128] sm:$0xff]
  %v60 = vld [vmem:[%s1 + $0x130] sm:$0xff]
  %v61 = vld [vmem:[%s1 + $0x138] sm:$0xff]
  %v62 = vld [vmem:[%s1 + $0x140] sm:$0xff]
  %v63 = vld [vmem:[%s1 + $0x148] sm:$0xff]
  %v64 = vld [vmem:[%s1 + $0x150] sm:$0xff]
  %v65 = vld [vmem:[%s1 + $0x158] sm:$0xff]
  %v66 = vld [vmem:[%s1 + $0x160] sm:$0xff]
  %v67 = vld [vmem:[%s1 + $0x168] sm:$0xff]
  %v68 = vld [vmem:[%s1 + $0x170] sm:$0xff]
  %v69 = vld [vmem:[%s1 + $0x178] sm:$0xff]
  %v70 = vld [vmem:[%s1 + $0x180] sm:$0xff]
  %v71 = vld [vmem:[%s1 + $0x188] sm:$0xff]
  %v72 = vld [vmem:[%s1 + $0x190] sm:$0xff]
  %v73 = vld [vmem:[%s1 + $0x198] sm:$0xff]
  %v74 = vld [vmem:[%s1 + $0x1a0] sm:$0xff]
  %v75 = vld [vmem:[%s1 + $0x1a8] sm:$0xff]
  %v76 = vld [vmem:[%s1 + $0x1b0] sm:$0xff]
  %v77 = vld [vmem:[%s1 + $0x1b8] sm:$0xff]
  %v78 = vld [vmem:[%s1 + $0x1c0] sm:$0xff]
  %v79 = vld [vmem:[%s1 + $0x1c8] sm:$0xff]
  %v80 = vld [vmem:[%s1 + $0x1d0] sm:$0xff]
  %v81 = vld [vmem:[%s1 + $0x1d8] sm:$0xff]
  %v82 = vld [vmem:[%s1 + $0x1e0] sm:$0xff]
  %v83 = vld [vmem:[%s1 + $0x1e8] sm:$0xff]
  %v84 = vld [vmem:[%s1 + $0x1f0] sm:$0xff]
  %v85 = vld [vmem:[%s1 + $0x1f8] sm:$0xff]
  %v86 = vld [vmem:[%s2] sm:$0xf]
  %v88 = vlaneseq
  %v89 = vshrl.u32 %v88, 7
  %v90 = vsub.s32 0, %v89
  %v91 = vrot.slane %v86, %v90
  %v92 = vlaneseq
  %v93 = vshrl.u32 %v92, 7
  %v94 = vsub.s32 1, %v93
  %v95 = vrot.slane %v86, %v94
  %v96 = vlaneseq
  %v97 = vshrl.u32 %v96, 7
  %v98 = vsub.s32 2, %v97
  %v99 = vrot.slane %v86, %v98
  %v100 = vlaneseq
  %v101 = vshrl.u32 %v100, 7
  %v102 = vsub.s32 3, %v101
  %v103 = vrot.slane %v86, %v102
  %v109 = vunpack.c.l.b16 %v21
  %v110 = vunpack.c.h.b16 %v21
  %v111 = vpack.c.b16 %v109, %v109
  %v112 = vpack.c.b16 %v110, %v110
  %v179 = vunpack.c.l.b16 %v22
  %v180 = vunpack.c.h.b16 %v22
  %v181 = vunpack.c.l.b16 %v23
  %v182 = vunpack.c.h.b16 %v23
  %v183 = vunpack.c.l.b16 %v24
  %v184 = vunpack.c.h.b16 %v24
  %v185 = vunpack.c.l.b16 %v25
  %v186 = vunpack.c.h.b16 %v25
  %v187 = vunpack.c.l.b16 %v26
  %v188 = vunpack.c.h.b16 %v26
  %v189 = vunpack.c.l.b16 %v27
  %v190 = vunpack.c.h.b16 %v27
  %v191 = vunpack.c.l.b16 %v28
  %v192 = vunpack.c.h.b16 %v28
  %v193 = vunpack.c.l.b16 %v29
  %v194 = vunpack.c.h.b16 %v29
  %v195 = vunpack.c.l.b16 %v30
  %v196 = vunpack.c.h.b16 %v30
  %v197 = vunpack.c.l.b16 %v31
  %v198 = vunpack.c.h.b16 %v31
  %v199 = vunpack.c.l.b16 %v32
  %v200 = vunpack.c.h.b16 %v32
  %v201 = vunpack.c.l.b16 %v33
  %v202 = vunpack.c.h.b16 %v33
  %v203 = vunpack.c.l.b16 %v34
  %v204 = vunpack.c.h.b16 %v34
  %v205 = vunpack.c.l.b16 %v35
  %v206 = vunpack.c.h.b16 %v35
  %v207 = vunpack.c.l.b16 %v36
  %v208 = vunpack.c.h.b16 %v36
  %v209 = vunpack.c.l.b16 %v37
  %v210 = vunpack.c.h.b16 %v37
  %v211 = vunpack.c.l.b16 %v38
  %v212 = vunpack.c.h.b16 %v38
  %v213 = vunpack.c.l.b16 %v39
  %v214 = vunpack.c.h.b16 %v39
  %v215 = vunpack.c.l.b16 %v40
  %v216 = vunpack.c.h.b16 %v40
  %v217 = vunpack.c.l.b16 %v41
  %v218 = vunpack.c.h.b16 %v41
  %v219 = vunpack.c.l.b16 %v42
  %v220 = vunpack.c.h.b16 %v42
  %v221 = vunpack.c.l.b16 %v43
  %v222 = vunpack.c.h.b16 %v43
  %v223 = vunpack.c.l.b16 %v44
  %v224 = vunpack.c.h.b16 %v44
  %v225 = vunpack.c.l.b16 %v45
  %v226 = vunpack.c.h.b16 %v45
  %v227 = vunpack.c.l.b16 %v46
  %v228 = vunpack.c.h.b16 %v46
  %v229 = vunpack.c.l.b16 %v47
  %v230 = vunpack.c.h.b16 %v47
  %v231 = vunpack.c.l.b16 %v48
  %v232 = vunpack.c.h.b16 %v48
  %v233 = vunpack.c.l.b16 %v49
  %v234 = vunpack.c.h.b16 %v49
  %v235 = vunpack.c.l.b16 %v50
  %v236 = vunpack.c.h.b16 %v50
  %v237 = vunpack.c.l.b16 %v51
  %v238 = vunpack.c.h.b16 %v51
  %v239 = vunpack.c.l.b16 %v52
  %v240 = vunpack.c.h.b16 %v52
  %v241 = vunpack.c.l.b16 %v53
  %v242 = vunpack.c.h.b16 %v53
  %v243 = vunpack.c.l.b16 %v54
  %v244 = vunpack.c.h.b16 %v54
  %v245 = vunpack.c.l.b16 %v55
  %v246 = vunpack.c.h.b16 %v55
  %v247 = vunpack.c.l.b16 %v56
  %v248 = vunpack.c.h.b16 %v56
  %v249 = vunpack.c.l.b16 %v57
  %v250 = vunpack.c.h.b16 %v57
  %v251 = vunpack.c.l.b16 %v58
  %v252 = vunpack.c.h.b16 %v58
  %v253 = vunpack.c.l.b16 %v59
  %v254 = vunpack.c.h.b16 %v59
  %v255 = vunpack.c.l.b16 %v60
  %v256 = vunpack.c.h.b16 %v60
  %v257 = vunpack.c.l.b16 %v61
  %v258 = vunpack.c.h.b16 %v61
  %v259 = vunpack.c.l.b16 %v62
  %v260 = vunpack.c.h.b16 %v62
  %v261 = vunpack.c.l.b16 %v63
  %v262 = vunpack.c.h.b16 %v63
  %v263 = vunpack.c.l.b16 %v64
  %v264 = vunpack.c.h.b16 %v64
  %v265 = vunpack.c.l.b16 %v65
  %v266 = vunpack.c.h.b16 %v65
  %v267 = vunpack.c.l.b16 %v66
  %v268 = vunpack.c.h.b16 %v66
  %v269 = vunpack.c.l.b16 %v67
  %v270 = vunpack.c.h.b16 %v67
  %v271 = vunpack.c.l.b16 %v68
  %v272 = vunpack.c.h.b16 %v68
  %v273 = vunpack.c.l.b16 %v69
  %v274 = vunpack.c.h.b16 %v69
  %v275 = vunpack.c.l.b16 %v70
  %v276 = vunpack.c.h.b16 %v70
  %v277 = vunpack.c.l.b16 %v71
  %v278 = vunpack.c.h.b16 %v71
  %v279 = vunpack.c.l.b16 %v72
  %v280 = vunpack.c.h.b16 %v72
  %v281 = vunpack.c.l.b16 %v73
  %v282 = vunpack.c.h.b16 %v73
  %v283 = vunpack.c.l.b16 %v74
  %v284 = vunpack.c.h.b16 %v74
  %v285 = vunpack.c.l.b16 %v75
  %v286 = vunpack.c.h.b16 %v75
  %v287 = vunpack.c.l.b16 %v76
  %v288 = vunpack.c.h.b16 %v76
  %v289 = vunpack.c.l.b16 %v77
  %v290 = vunpack.c.h.b16 %v77
  %v291 = vunpack.c.l.b16 %v78
  %v292 = vunpack.c.h.b16 %v78
  %v293 = vunpack.c.l.b16 %v79
  %v294 = vunpack.c.h.b16 %v79
  %v295 = vunpack.c.l.b16 %v80
  %v296 = vunpack.c.h.b16 %v80
  %v297 = vunpack.c.l.b16 %v81
  %v298 = vunpack.c.h.b16 %v81
  %v299 = vunpack.c.l.b16 %v82
  %v300 = vunpack.c.h.b16 %v82
  %v301 = vunpack.c.l.b16 %v83
  %v302 = vunpack.c.h.b16 %v83
  %v303 = vunpack.c.l.b16 %v84
  %v304 = vunpack.c.h.b16 %v84
  %v305 = vunpack.c.l.b16 %v85
  %v306 = vunpack.c.h.b16 %v85
  %v307 = vpack.c.b16 %v183, %v179
  %v308 = vpack.c.b16 %v184, %v180
  %v309 = vpack.c.b16 %v185, %v181
  %v310 = vpack.c.b16 %v186, %v182
  %v311 = vpack.c.b16 %v191, %v187
  %v312 = vpack.c.b16 %v192, %v188
  %v313 = vpack.c.b16 %v193, %v189
  %v314 = vpack.c.b16 %v194, %v190
  %v315 = vpack.c.b16 %v199, %v195
  %v316 = vpack.c.b16 %v200, %v196
  %v317 = vpack.c.b16 %v201, %v197
  %v318 = vpack.c.b16 %v202, %v198
  %v319 = vpack.c.b16 %v207, %v203
  %v320 = vpack.c.b16 %v208, %v204
  %v321 = vpack.c.b16 %v209, %v205
  %v322 = vpack.c.b16 %v210, %v206
  %v323 = vpack.c.b16 %v215, %v211
  %v324 = vpack.c.b16 %v216, %v212
  %v325 = vpack.c.b16 %v217, %v213
  %v326 = vpack.c.b16 %v218, %v214
  %v327 = vpack.c.b16 %v223, %v219
  %v328 = vpack.c.b16 %v224, %v220
  %v329 = vpack.c.b16 %v225, %v221
  %v330 = vpack.c.b16 %v226, %v222
  %v331 = vpack.c.b16 %v231, %v227
  %v332 = vpack.c.b16 %v232, %v228
  %v333 = vpack.c.b16 %v233, %v229
  %v334 = vpack.c.b16 %v234, %v230
  %v335 = vpack.c.b16 %v239, %v235
  %v336 = vpack.c.b16 %v240, %v236
  %v337 = vpack.c.b16 %v241, %v237
  %v338 = vpack.c.b16 %v242, %v238
  %v339 = vpack.c.b16 %v247, %v243
  %v340 = vpack.c.b16 %v248, %v244
  %v341 = vpack.c.b16 %v249, %v245
  %v342 = vpack.c.b16 %v250, %v246
  %v343 = vpack.c.b16 %v255, %v251
  %v344 = vpack.c.b16 %v256, %v252
  %v345 = vpack.c.b16 %v257, %v253
  %v346 = vpack.c.b16 %v258, %v254
  %v347 = vpack.c.b16 %v263, %v259
  %v348 = vpack.c.b16 %v264, %v260
  %v349 = vpack.c.b16 %v265, %v261
  %v350 = vpack.c.b16 %v266, %v262
  %v351 = vpack.c.b16 %v271, %v267
  %v352 = vpack.c.b16 %v272, %v268
  %v353 = vpack.c.b16 %v273, %v269
  %v354 = vpack.c.b16 %v274, %v270
  %v355 = vpack.c.b16 %v279, %v275
  %v356 = vpack.c.b16 %v280, %v276
  %v357 = vpack.c.b16 %v281, %v277
  %v358 = vpack.c.b16 %v282, %v278
  %v359 = vpack.c.b16 %v287, %v283
  %v360 = vpack.c.b16 %v288, %v284
  %v361 = vpack.c.b16 %v289, %v285
  %v362 = vpack.c.b16 %v290, %v286
  %v363 = vpack.c.b16 %v295, %v291
  %v364 = vpack.c.b16 %v296, %v292
  %v365 = vpack.c.b16 %v297, %v293
  %v366 = vpack.c.b16 %v298, %v294
  %v367 = vpack.c.b16 %v303, %v299
  %v368 = vpack.c.b16 %v304, %v300
  %v369 = vpack.c.b16 %v305, %v301
  %v370 = vpack.c.b16 %v306, %v302
  %435 = vmatprep.subr.bf16.mxu0 %v308
  %436 = vmatpush1.bf16.msra.mxu0 %v307
  %437 = vmatprep.subr.bf16.mxu0 %v312
  %438 = vmatpush1.bf16.msra.mxu0 %v311
  %439 = vmatprep.subr.bf16.mxu0 %v316
  %440 = vmatpush1.bf16.msra.mxu0 %v315
  %441 = vmatprep.subr.bf16.mxu0 %v320
  %442 = vmatpush1.bf16.msra.mxu0 %v319
  %443 = vmatprep.subr.bf16.mxu0 %v324
  %444 = vmatpush1.bf16.msra.mxu0 %v323
  %445 = vmatprep.subr.bf16.mxu0 %v328
  %446 = vmatpush1.bf16.msra.mxu0 %v327
  %447 = vmatprep.subr.bf16.mxu0 %v332
  %448 = vmatpush1.bf16.msra.mxu0 %v331
  %449 = vmatprep.subr.bf16.mxu0 %v336
  %450 = vmatpush1.bf16.msra.mxu0 %v335
  %451 = vmatprep.subr.bf16.mxu0 %v340
  %452 = vmatpush1.bf16.msra.mxu0 %v339
  %453 = vmatprep.subr.bf16.mxu0 %v344
  %454 = vmatpush1.bf16.msra.mxu0 %v343
  %455 = vmatprep.subr.bf16.mxu0 %v348
  %456 = vmatpush1.bf16.msra.mxu0 %v347
  %457 = vmatprep.subr.bf16.mxu0 %v352
  %458 = vmatpush1.bf16.msra.mxu0 %v351
  %459 = vmatprep.subr.bf16.mxu0 %v356
  %460 = vmatpush1.bf16.msra.mxu0 %v355
  %461 = vmatprep.subr.bf16.mxu0 %v360
  %462 = vmatpush1.bf16.msra.mxu0 %v359
  %463 = vmatprep.subr.bf16.mxu0 %v364
  %464 = vmatpush1.bf16.msra.mxu0 %v363
  %465 = vmatprep.subr.bf16.mxu0 %v368
  %466 = vmatpush1.bf16.msra.mxu0 %v367
  %467 = vmatprep.mubr.bf16.mxu0 %v112
  %468 = vmatmul.mubr.bf16.gmra.mrb[0].mxu0 %v111
  %v469 = vpop.f32.mrb[0].mxu0
  %v470 = vadd.f32 %v91, %v469
  %v471 = vpop.f32.mrb[0].mxu0
  %v472 = vadd.f32 %v95, %v471
  %v473 = vpop.f32.mrb[0].mxu0
  %v474 = vpop.f32.mrb[0].mxu0
  %475 = vdwg.mxu0
  %476 = vmatprep.subr.bf16.mxu0 %v310
  %477 = vmatpush1.bf16.msra.mxu0 %v309
  %478 = vmatprep.subr.bf16.mxu0 %v314
  %479 = vmatpush1.bf16.msra.mxu0 %v313
  %480 = vmatprep.subr.bf16.mxu0 %v318
  %481 = vmatpush1.bf16.msra.mxu0 %v317
  %482 = vmatprep.subr.bf16.mxu0 %v322
  %483 = vmatpush1.bf16.msra.mxu0 %v321
  %484 = vmatprep.subr.bf16.mxu0 %v326
  %485 = vmatpush1.bf16.msra.mxu0 %v325
  %486 = vmatprep.subr.bf16.mxu0 %v330
  %487 = vmatpush1.bf16.msra.mxu0 %v329
  %488 = vmatprep.subr.bf16.mxu0 %v334
  %489 = vmatpush1.bf16.msra.mxu0 %v333
  %490 = vmatprep.subr.bf16.mxu0 %v338
  %491 = vmatpush1.bf16.msra.mxu0 %v337
  %492 = vmatprep.subr.bf16.mxu0 %v342
  %493 = vmatpush1.bf16.msra.mxu0 %v341
  %494 = vmatprep.subr.bf16.mxu0 %v346
  %495 = vmatpush1.bf16.msra.mxu0 %v345
  %496 = vmatprep.subr.bf16.mxu0 %v350
  %497 = vmatpush1.bf16.msra.mxu0 %v349
  %498 = vmatprep.subr.bf16.mxu0 %v354
  %499 = vmatpush1.bf16.msra.mxu0 %v353
  %500 = vmatprep.subr.bf16.mxu0 %v358
  %501 = vmatpush1.bf16.msra.mxu0 %v357
  %502 = vmatprep.subr.bf16.mxu0 %v362
  %503 = vmatpush1.bf16.msra.mxu0 %v361
  %504 = vmatprep.subr.bf16.mxu0 %v366
  %505 = vmatpush1.bf16.msra.mxu0 %v365
  %506 = vmatprep.subr.bf16.mxu0 %v370
  %507 = vmatpush1.bf16.msra.mxu0 %v369
  %508 = vmatprep.mubr.bf16.mxu0 %v112
  %509 = vmatmul.mubr.bf16.gmra.mrb[0].mxu0 %v111
  %v510 = vpop.f32.mrb[0].mxu0
  %v511 = vadd.f32 %v99, %v510
  %v512 = vpop.f32.mrb[0].mxu0
  %v513 = vadd.f32 %v103, %v512
  %v514 = vpop.f32.mrb[0].mxu0
  %v515 = vpop.f32.mrb[0].mxu0
  %516 = vdwg.mxu0
  %v517 = vmax.f32 %v470, 0.0
  %v518 = vmax.f32 %v472, 0.0
  %v519 = vmax.f32 %v511, 0.0
  %v520 = vmax.f32 %v513, 0.0
  %v521 = vpack.c.bf16 %v517, %v517
  %v522 = vpack.c.bf16 %v518, %v518
  %v523 = vpack.c.bf16 %v519, %v519
  %v524 = vpack.c.bf16 %v520, %v520
  %v525 = vld [vmem:[%s3] sm:$0xf]
  %v526 = vld [vmem:[%s3 + $0x4] sm:$0xf]
  %v527 = vld [vmem:[%s3 + $0x8] sm:$0xf]
  %v528 = vld [vmem:[%s3 + $0xc] sm:$0xf]
  %v529 = vld [vmem:[%s3 + $0x10] sm:$0xf]
  %v530 = vld [vmem:[%s3 + $0x14] sm:$0xf]
  %v531 = vld [vmem:[%s3 + $0x18] sm:$0xf]
  %v532 = vld [vmem:[%s3 + $0x1c] sm:$0xf]
  %v533 = vld [vmem:[%s3 + $0x20] sm:$0xf]
  %v534 = vld [vmem:[%s3 + $0x24] sm:$0xf]
  %v535 = vld [vmem:[%s3 + $0x28] sm:$0xf]
  %v536 = vld [vmem:[%s3 + $0x2c] sm:$0xf]
  %v537 = vld [vmem:[%s3 + $0x30] sm:$0xf]
  %v538 = vld [vmem:[%s3 + $0x34] sm:$0xf]
  %v539 = vld [vmem:[%s3 + $0x38] sm:$0xf]
  %v540 = vld [vmem:[%s3 + $0x3c] sm:$0xf]
  %v541 = vld [vmem:[%s3 + $0x40] sm:$0xf]
  %v542 = vld [vmem:[%s3 + $0x44] sm:$0xf]
  %v543 = vld [vmem:[%s3 + $0x48] sm:$0xf]
  %v544 = vld [vmem:[%s3 + $0x4c] sm:$0xf]
  %v545 = vld [vmem:[%s3 + $0x50] sm:$0xf]
  %v546 = vld [vmem:[%s3 + $0x54] sm:$0xf]
  %v547 = vld [vmem:[%s3 + $0x58] sm:$0xf]
  %v548 = vld [vmem:[%s3 + $0x5c] sm:$0xf]
  %v549 = vld [vmem:[%s3 + $0x60] sm:$0xf]
  %v550 = vld [vmem:[%s3 + $0x64] sm:$0xf]
  %v551 = vld [vmem:[%s3 + $0x68] sm:$0xf]
  %v552 = vld [vmem:[%s3 + $0x6c] sm:$0xf]
  %v553 = vld [vmem:[%s3 + $0x70] sm:$0xf]
  %v554 = vld [vmem:[%s3 + $0x74] sm:$0xf]
  %v555 = vld [vmem:[%s3 + $0x78] sm:$0xf]
  %v556 = vld [vmem:[%s3 + $0x7c] sm:$0xf]
  %v557 = vld [vmem:[%s3 + $0x80] sm:$0xf]
  %v558 = vld [vmem:[%s3 + $0x84] sm:$0xf]
  %v559 = vld [vmem:[%s3 + $0x88] sm:$0xf]
  %v560 = vld [vmem:[%s3 + $0x8c] sm:$0xf]
  %v561 = vld [vmem:[%s3 + $0x90] sm:$0xf]
  %v562 = vld [vmem:[%s3 + $0x94] sm:$0xf]
  %v563 = vld [vmem:[%s3 + $0x98] sm:$0xf]
  %v564 = vld [vmem:[%s3 + $0x9c] sm:$0xf]
  %v565 = vld [vmem:[%s3 + $0xa0] sm:$0xf]
  %v566 = vld [vmem:[%s3 + $0xa4] sm:$0xf]
  %v567 = vld [vmem:[%s3 + $0xa8] sm:$0xf]
  %v568 = vld [vmem:[%s3 + $0xac] sm:$0xf]
  %v569 = vld [vmem:[%s3 + $0xb0] sm:$0xf]
  %v570 = vld [vmem:[%s3 + $0xb4] sm:$0xf]
  %v571 = vld [vmem:[%s3 + $0xb8] sm:$0xf]
  %v572 = vld [vmem:[%s3 + $0xbc] sm:$0xf]
  %v573 = vld [vmem:[%s3 + $0xc0] sm:$0xf]
  %v574 = vld [vmem:[%s3 + $0xc4] sm:$0xf]
  %v575 = vld [vmem:[%s3 + $0xc8] sm:$0xf]
  %v576 = vld [vmem:[%s3 + $0xcc] sm:$0xf]
  %v577 = vld [vmem:[%s3 + $0xd0] sm:$0xf]
  %v578 = vld [vmem:[%s3 + $0xd4] sm:$0xf]
  %v579 = vld [vmem:[%s3 + $0xd8] sm:$0xf]
  %v580 = vld [vmem:[%s3 + $0xdc] sm:$0xf]
  %v581 = vld [vmem:[%s3 + $0xe0] sm:$0xf]
  %v582 = vld [vmem:[%s3 + $0xe4] sm:$0xf]
  %v583 = vld [vmem:[%s3 + $0xe8] sm:$0xf]
  %v584 = vld [vmem:[%s3 + $0xec] sm:$0xf]
  %v585 = vld [vmem:[%s3 + $0xf0] sm:$0xf]
  %v586 = vld [vmem:[%s3 + $0xf4] sm:$0xf]
  %v587 = vld [vmem:[%s3 + $0xf8] sm:$0xf]
  %v588 = vld [vmem:[%s3 + $0xfc] sm:$0xf]
  %v589 = vld [vmem:[%s4] sm:$0x1]
  %v591 = vlaneseq
  %v592 = vshrl.u32 %v591, 7
  %v593 = vsub.s32 0, %v592
  %v594 = vrot.slane %v589, %v593
  %v660 = vunpack.c.l.b16 %v525
  %v661 = vunpack.c.l.b16 %v526
  %v662 = vunpack.c.l.b16 %v527
  %v663 = vunpack.c.l.b16 %v528
  %v664 = vunpack.c.l.b16 %v529
  %v665 = vunpack.c.l.b16 %v530
  %v666 = vunpack.c.l.b16 %v531
  %v667 = vunpack.c.l.b16 %v532
  %v668 = vunpack.c.l.b16 %v533
  %v669 = vunpack.c.l.b16 %v534
  %v670 = vunpack.c.l.b16 %v535
  %v671 = vunpack.c.l.b16 %v536
  %v672 = vunpack.c.l.b16 %v537
  %v673 = vunpack.c.l.b16 %v538
  %v674 = vunpack.c.l.b16 %v539
  %v675 = vunpack.c.l.b16 %v540
  %v676 = vunpack.c.l.b16 %v541
  %v677 = vunpack.c.l.b16 %v542
  %v678 = vunpack.c.l.b16 %v543
  %v679 = vunpack.c.l.b16 %v544
  %v680 = vunpack.c.l.b16 %v545
  %v681 = vunpack.c.l.b16 %v546
  %v682 = vunpack.c.l.b16 %v547
  %v683 = vunpack.c.l.b16 %v548
  %v684 = vunpack.c.l.b16 %v549
  %v685 = vunpack.c.l.b16 %v550
  %v686 = vunpack.c.l.b16 %v551
  %v687 = vunpack.c.l.b16 %v552
  %v688 = vunpack.c.l.b16 %v553
  %v689 = vunpack.c.l.b16 %v554
  %v690 = vunpack.c.l.b16 %v555
  %v691 = vunpack.c.l.b16 %v556
  %v692 = vunpack.c.l.b16 %v557
  %v693 = vunpack.c.l.b16 %v558
  %v694 = vunpack.c.l.b16 %v559
  %v695 = vunpack.c.l.b16 %v560
  %v696 = vunpack.c.l.b16 %v561
  %v697 = vunpack.c.l.b16 %v562
  %v698 = vunpack.c.l.b16 %v563
  %v699 = vunpack.c.l.b16 %v564
  %v700 = vunpack.c.l.b16 %v565
  %v701 = vunpack.c.l.b16 %v566
  %v702 = vunpack.c.l.b16 %v567
  %v703 = vunpack.c.l.b16 %v568
  %v704 = vunpack.c.l.b16 %v569
  %v705 = vunpack.c.l.b16 %v570
  %v706 = vunpack.c.l.b16 %v571
  %v707 = vunpack.c.l.b16 %v572
  %v708 = vunpack.c.l.b16 %v573
  %v709 = vunpack.c.l.b16 %v574
  %v710 = vunpack.c.l.b16 %v575
  %v711 = vunpack.c.l.b16 %v576
  %v712 = vunpack.c.l.b16 %v577
  %v713 = vunpack.c.l.b16 %v578
  %v714 = vunpack.c.l.b16 %v579
  %v715 = vunpack.c.l.b16 %v580
  %v716 = vunpack.c.l.b16 %v581
  %v717 = vunpack.c.l.b16 %v582
  %v718 = vunpack.c.l.b16 %v583
  %v719 = vunpack.c.l.b16 %v584
  %v720 = vunpack.c.l.b16 %v585
  %v721 = vunpack.c.l.b16 %v586
  %v722 = vunpack.c.l.b16 %v587
  %v723 = vunpack.c.l.b16 %v588
  %v724 = vpack.c.b16 %v661, %v660
  %v725 = vpack.c.b16 %v663, %v662
  %v726 = vpack.c.b16 %v665, %v664
  %v727 = vpack.c.b16 %v667, %v666
  %v728 = vpack.c.b16 %v669, %v668
  %v729 = vpack.c.b16 %v671, %v670
  %v730 = vpack.c.b16 %v673, %v672
  %v731 = vpack.c.b16 %v675, %v674
  %v732 = vpack.c.b16 %v677, %v676
  %v733 = vpack.c.b16 %v679, %v678
  %v734 = vpack.c.b16 %v681, %v680
  %v735 = vpack.c.b16 %v683, %v682
  %v736 = vpack.c.b16 %v685, %v684
  %v737 = vpack.c.b16 %v687, %v686
  %v738 = vpack.c.b16 %v689, %v688
  %v739 = vpack.c.b16 %v691, %v690
  %v740 = vpack.c.b16 %v693, %v692
  %v741 = vpack.c.b16 %v695, %v694
  %v742 = vpack.c.b16 %v697, %v696
  %v743 = vpack.c.b16 %v699, %v698
  %v744 = vpack.c.b16 %v701, %v700
  %v745 = vpack.c.b16 %v703, %v702
  %v746 = vpack.c.b16 %v705, %v704
  %v747 = vpack.c.b16 %v707, %v706
  %v748 = vpack.c.b16 %v709, %v708
  %v749 = vpack.c.b16 %v711, %v710
  %v750 = vpack.c.b16 %v713, %v712
  %v751 = vpack.c.b16 %v715, %v714
  %v752 = vpack.c.b16 %v717, %v716
  %v753 = vpack.c.b16 %v719, %v718
  %v754 = vpack.c.b16 %v721, %v720
  %v755 = vpack.c.b16 %v723, %v722
  %788 = vmatprep.subr.bf16.mxu0 0
  %789 = vmatpush1.bf16.msra.mxu0 %v724
  %790 = vmatprep.subr.bf16.mxu0 0
  %791 = vmatpush1.bf16.msra.mxu0 %v725
  %792 = vmatprep.subr.bf16.mxu0 0
  %793 = vmatpush1.bf16.msra.mxu0 %v726
  %794 = vmatprep.subr.bf16.mxu0 0
  %795 = vmatpush1.bf16.msra.mxu0 %v727
  %796 = vmatprep.subr.bf16.mxu0 0
  %797 = vmatpush1.bf16.msra.mxu0 %v728
  %798 = vmatprep.subr.bf16.mxu0 0
  %799 = vmatpush1.bf16.msra.mxu0 %v729
  %800 = vmatprep.subr.bf16.mxu0 0
  %801 = vmatpush1.bf16.msra.mxu0 %v730
  %802 = vmatprep.subr.bf16.mxu0 0
  %803 = vmatpush1.bf16.msra.mxu0 %v731
  %804 = vmatprep.subr.bf16.mxu0 0
  %805 = vmatpush1.bf16.msra.mxu0 %v732
  %806 = vmatprep.subr.bf16.mxu0 0
  %807 = vmatpush1.bf16.msra.mxu0 %v733
  %808 = vmatprep.subr.bf16.mxu0 0
  %809 = vmatpush1.bf16.msra.mxu0 %v734
  %810 = vmatprep.subr.bf16.mxu0 0
  %811 = vmatpush1.bf16.msra.mxu0 %v735
  %812 = vmatprep.subr.bf16.mxu0 0
  %813 = vmatpush1.bf16.msra.mxu0 %v736
  %814 = vmatprep.subr.bf16.mxu0 0
  %815 = vmatpush1.bf16.msra.mxu0 %v737
  %816 = vmatprep.subr.bf16.mxu0 0
  %817 = vmatpush1.bf16.msra.mxu0 %v738
  %818 = vmatprep.subr.bf16.mxu0 0
  %819 = vmatpush1.bf16.msra.mxu0 %v739
  %820 = vmatprep.mubr.bf16.mxu0 %v522
  %821 = vmatmul.mubr.bf16.gmra.mrb[0].mxu0 %v521
  %v822 = vpop.f32.mrb[0].mxu0
  %v823 = vadd.f32 %v594, %v822
  %v824 = vpop.f32.mrb[0].mxu0
  %v825 = vpop.f32.mrb[0].mxu0
  %v826 = vpop.f32.mrb[0].mxu0
  %827 = vdwg.mxu0
  %828 = vmatprep.subr.bf16.mxu0 0
  %829 = vmatpush1.bf16.msra.mxu0 %v740
  %830 = vmatprep.subr.bf16.mxu0 0
  %831 = vmatpush1.bf16.msra.mxu0 %v741
  %832 = vmatprep.subr.bf16.mxu0 0
  %833 = vmatpush1.bf16.msra.mxu0 %v742
  %834 = vmatprep.subr.bf16.mxu0 0
  %835 = vmatpush1.bf16.msra.mxu0 %v743
  %836 = vmatprep.subr.bf16.mxu0 0
  %837 = vmatpush1.bf16.msra.mxu0 %v744
  %838 = vmatprep.subr.bf16.mxu0 0
  %839 = vmatpush1.bf16.msra.mxu0 %v745
  %840 = vmatprep.subr.bf16.mxu0 0
  %841 = vmatpush1.bf16.msra.mxu0 %v746
  %842 = vmatprep.subr.bf16.mxu0 0
  %843 = vmatpush1.bf16.msra.mxu0 %v747
  %844 = vmatprep.subr.bf16.mxu0 0
  %845 = vmatpush1.bf16.msra.mxu0 %v748
  %846 = vmatprep.subr.bf16.mxu0 0
  %847 = vmatpush1.bf16.msra.mxu0 %v749
  %848 = vmatprep.subr.bf16.mxu0 0
  %849 = vmatpush1.bf16.msra.mxu0 %v750
  %850 = vmatprep.subr.bf16.mxu0 0
  %851 = vmatpush1.bf16.msra.mxu0 %v751
  %852 = vmatprep.subr.bf16.mxu0 0
  %853 = vmatpush1.bf16.msra.mxu0 %v752
  %854 = vmatprep.subr.bf16.mxu0 0
  %855 = vmatpush1.bf16.msra.mxu0 %v753
  %856 = vmatprep.subr.bf16.mxu0 0
  %857 = vmatpush1.bf16.msra.mxu0 %v754
  %858 = vmatprep.subr.bf16.mxu0 0
  %859 = vmatpush1.bf16.msra.mxu0 %v755
  %860 = vmatprep.mubr.bf16.mxu0 %v524
  %861 = vmatmul.mubr.bf16.gmra.mrb[0].mxu0 %v523
  %v862 = vpop.f32.mrb[0].mxu0
  %v863 = vadd.f32 %v823, %v862
  %v864 = vpop.f32.mrb[0].mxu0
  %v865 = vpop.f32.mrb[0].mxu0
  %v866 = vpop.f32.mrb[0].mxu0
  %867 = vdwg.mxu0
  %v868 = vlaneseq
  %v869 = vand.u32 %v868, 127
  %vm870 = vcmp.lt.s32.totalorder %v869, 6
  %v871 = vsel %vm870, %v863, -inf
  %872 = vmax.xlane.f32.xlu0 %v871
  %v873 = vpop.xlane.xlu0 %872
  %v874 = vsub.f32 %v871, %v873
  %v875 = vmul.f32 %v874, 1.442695
  %v876 = vpow.pop %v875
  %877 = vadd.xlane.f32.xlu0 %v876
  %v878 = vpop.xlane.xlu0 %877
  %v879 = vrcp.pop %v878
  %v880 = vmul.f32 %v876, %v879
  %vm881 = vcmp.eq.s32.totalorder %v869, 6
  %v882 = vsel %vm881, %v863, 0.0
  %v883 = vsel %vm870, %v880, %v882
  %884 = vst [vmem:[%s5] sm:$0xff] %v883
  // Predicated region
  $region22: #{_lambda_.7} parent=0 // pred_check
    _
  $region23: #{_lambda_.7} parent=0 // pred_check_branch
    %886 = sbr.rel (0) target = $region25
  $region24: #{_lambda_.7} parent=0 // pred_region
    _
  $region25: #{_lambda_.7} parent=0 // pred_fallthru
    _
  // Predicated region
  $region26: #{_lambda_.7} parent=0 // pred_check
    _
  $region27: #{_lambda_.7} parent=0 // pred_check_branch
    %888 = sbr.rel (0) target = $region29
  $region28: #{_lambda_.7} parent=0 // pred_region
    _
  $region29: #{_lambda_.7} parent=0 // pred_fallthru
    _

</llo_original>
